<compile_context>
chip_gen: v6e
topology: v6e:2x2x1
jax: 0.10.0
libtpu: 0.0.40
codegen_flags: <defaults>
</compile_context>

<pallas_src>
import functools

import numpy as np
import jax
import jax.numpy as jnp
from jax import lax
from jax.experimental import pallas as pl
from jax.experimental.pallas import tpu as pltpu

_BN_EPS = 1e-5
_OUT_PAD = 128    # output lanes (dense stores); sliced back to 4 / 1 in wrapper
_H_CHUNK = 128    # hidden-dim chunk for the second matmul


# ----------------------------------------------------------------------------
# Edge helpers (exact numpy port of the torch/pandas staticmethods)
# ----------------------------------------------------------------------------
def get_all_pair(ar):
    return np.array(np.meshgrid(ar, ar)).T.reshape(-1, 2)


def get_edges(r, c):
    edges = np.empty((0, 2), dtype=int)
    row_edges = get_all_pair(np.arange(c))
    for i in range(r):
        edges = np.concatenate((edges, row_edges + i * c), axis=0)
    col_edges = get_all_pair(np.arange(0, r * c, c))
    for i in range(c):
        edges = np.concatenate((edges, col_edges + i), axis=0)
    edges = np.unique(edges, axis=0)
    edges = edges[np.lexsort((edges[:, 1], edges[:, 0]))]
    assert len(edges) == r * c * (r + c - 1)
    return edges


def create_edge_labels(all_edges, edge_list):
    es = set((int(a), int(b)) for a, b in edge_list)
    return np.array([1 if (int(a), int(b)) in es else 0 for a, b in all_edges],
                    dtype=np.int64)


# ----------------------------------------------------------------------------
# Pallas kernel: fused   y = ReLU(x @ W1'[head] + b1'[head]) @ W2[head] + b2[head]
# with the mask epilogue folded in.  BatchNorm is already folded into W1'/b1'.
# ----------------------------------------------------------------------------
def fused_head_kernel(head_ids_ref, x_ref, mask_ref,
                      w1_ref, b1_ref, w2_ref, b2_ref, o_ref):
    # head_ids_ref (SMEM, scalar-prefetched) is only consumed by the index_maps.
    del head_ids_ref
    x = x_ref[...]                                   # (tm, K) bf16
    tm = x.shape[0]
    h_mid = w1_ref.shape[-1]
    out_w = o_ref.shape[-1]
    chunk = _H_CHUNK if h_mid % _H_CHUNK == 0 else h_mid

    # Chunk the hidden dim so the live f32 intermediate stays small even at
    # large row tiles (keeps vreg/VMEM pressure down).
    acc = jnp.zeros((tm, out_w), jnp.float32)
    for j in range(h_mid // chunk):                  # static unroll (256/128 = 2)
        lo = j * chunk
        hj = jnp.dot(x, w1_ref[:, lo:lo + chunk],
                     preferred_element_type=jnp.float32)          # MXU, f32 acc
        hj = jnp.maximum(hj + b1_ref[:, lo:lo + chunk], 0.0)      # bias + ReLU
        acc = acc + jnp.dot(hj.astype(jnp.bfloat16), w2_ref[lo:lo + chunk, :],
                            preferred_element_type=jnp.float32)
    out = acc + b2_ref[...]                          # (tm, out_w) f32

    # Fused masking epilogue (saves a second HBM pass over the logits):
    #   mask == 1 : padded "extra row"  -> logits [1, 0, 0, ...]
    #   mask == 2 : dropped edge        -> -inf
    m = mask_ref[...]                                # (tm, 1) int32
    col = lax.broadcasted_iota(jnp.int32, out.shape, 1)
    extra_row_val = jnp.where(col == 0, 1.0, 0.0).astype(jnp.float32)
    out = jnp.where(m == 1, extra_row_val, out)
    out = jnp.where(m == 2, -jnp.inf, out)
    o_ref[...] = out.astype(o_ref.dtype)             # bf16 store, lane-dense


@functools.partial(jax.jit, static_argnames=("tm",))
def _fused_heads(head_ids, x, mask, w1, b1, w2, b2, *, tm):
    """Single pallas_call running both heads over row tiles of size tm."""
    n_pad, k = x.shape
    _, _, h_mid = w1.shape
    out_w = w2.shape[-1]
    grid_spec = pltpu.PrefetchScalarGridSpec(
        num_scalar_prefetch=1,                       # head_ids -> SMEM
        grid=(n_pad // tm,),
        in_specs=[
            pl.BlockSpec((tm, k), lambda i, hid: (i, 0)),            # x
            pl.BlockSpec((tm, 1), lambda i, hid: (i, 0)),            # mask codes
            pl.BlockSpec((None, k, h_mid), lambda i, hid: (hid[i], 0, 0)),     # w1
            pl.BlockSpec((None, 1, h_mid), lambda i, hid: (hid[i], 0, 0)),     # b1
            pl.BlockSpec((None, h_mid, out_w), lambda i, hid: (hid[i], 0, 0)), # w2
            pl.BlockSpec((None, 1, out_w), lambda i, hid: (hid[i], 0, 0)),     # b2
        ],
        out_specs=pl.BlockSpec((tm, out_w), lambda i, hid: (i, 0)),
    )
    return pl.pallas_call(
        fused_head_kernel,
        out_shape=jax.ShapeDtypeStruct((n_pad, out_w), jnp.bfloat16),
        grid_spec=grid_spec,
        compiler_params=pltpu.CompilerParams(
            dimension_semantics=("parallel",)),      # >=2 tiles -> both TCs on v7x
    )(head_ids, x, mask, w1, b1, w2, b2)


# ----------------------------------------------------------------------------
# Host-side parameter preparation: BN folding, common-K pad, head stacking
# ----------------------------------------------------------------------------
def _round_up(n, m):
    return ((n + m - 1) // m) * m


def _pick_tm(total_rows):
    """Row-tile bucket: larger tiles amortize per-grid-step overhead on big
    batches; 128 keeps padding waste low for tiny ones."""
    if total_rows <= 1024:
        return 128
    if total_rows <= 4096:
        return 256
    return 512


def init_head_params(key, h_in, h_mid, h_out):
    """Raw (torch-like) parameter shapes from the module's __init__."""
    k1, k2, k3, k4 = jax.random.split(key, 4)
    return {
        "w1": jax.random.normal(k1, (h_in, h_mid), jnp.float32) * 0.05,
        "b1": jax.random.normal(k2, (1, h_mid), jnp.float32) * 0.05,
        "gamma": jnp.ones((1, h_mid), jnp.float32),   # BatchNorm1d defaults
        "beta": jnp.zeros((1, h_mid), jnp.float32),
        "mean": jnp.zeros((1, h_mid), jnp.float32),
        "var": jnp.ones((1, h_mid), jnp.float32),
        "w2": jax.random.normal(k3, (h_mid, h_out), jnp.float32) * 0.05,
        "b2": jax.random.normal(k4, (1, h_out), jnp.float32) * 0.05,
    }


def prepare_fused_params(comp_raw, edge_raw):
    """Fold eval-mode BN into W1/b1 (f32), zero-pad to a common K and 128
    output lanes, stack both heads along a leading axis, cast weights to bf16."""
    h_mid = comp_raw["w1"].shape[1]
    assert edge_raw["w1"].shape[1] == h_mid
    k_nat = max(comp_raw["w1"].shape[0], edge_raw["w1"].shape[0])  # = 2*H
    k_pad = _round_up(k_nat, 16)          # bf16 sublane packing only; no 128 pad
    heads = []
    for p in (comp_raw, edge_raw):
        scale = p["gamma"] / jnp.sqrt(p["var"] + _BN_EPS)          # (1, h_mid)
        w1 = p["w1"] * scale                                       # column scale
        b1 = (p["b1"] - p["mean"]) * scale + p["beta"]
        w1 = jnp.pad(w1, ((0, k_pad - w1.shape[0]), (0, 0)))       # pad K
        w2 = jnp.pad(p["w2"], ((0, 0), (0, _OUT_PAD - p["w2"].shape[1])))
        b2 = jnp.pad(p["b2"], ((0, 0), (0, _OUT_PAD - p["b2"].shape[1])))
        heads.append((w1, b1, w2, b2))
    return {
        "w1": jnp.stack([h[0] for h in heads]).astype(jnp.bfloat16),  # (2,K,256)
        "b1": jnp.stack([h[1] for h in heads]).astype(jnp.float32),   # (2,1,256)
        "w2": jnp.stack([h[2] for h in heads]).astype(jnp.bfloat16),  # (2,256,128)
        "b2": jnp.stack([h[3] for h in heads]).astype(jnp.float32),   # (2,1,128)
        "k_pad": k_pad,
    }


# ----------------------------------------------------------------------------
# Host numpy assembly of the ragged per-table features (data-dependent shapes)
# ----------------------------------------------------------------------------
def _assemble_host(h_np, examples):
    """Returns (rc_x, rc_mask, e_x, e_mask, rc_labels, e_labels).  Mask codes:
    0 = normal, 1 = padded 'extra row' (-> [1,0,0,...]), 2 = dropped edge (-> -inf)."""
    H = h_np.shape[-1]
    rc_feats, rc_mask, rc_labels = [], [], []
    e_feats, e_mask, e_labels = [], [], []
    for i, x in enumerate(examples):
        r, c = x["num_rows"], x["num_cols"]
        idxs = np.asarray(x["first_cell_idxs"], dtype=np.int64)
        fce = h_np[i][idxs]                               # (r_*c, H)
        assert fce.shape[0] % c == 0
        tbl = fce.reshape(-1, c, H)
        row_embs, col_embs = tbl.mean(axis=1), tbl.mean(axis=0)
        r_ = row_embs.shape[0]
        assert r_ <= r

        rc_feats += [row_embs, np.zeros((r - r_, H), np.float32), col_embs]
        rc_mask += [0] * r_ + [1] * (r - r_) + [0] * c
        rc_labels += list(x["row_label"]) + list(x["col_label"])

        table_edges = get_edges(r_, c)
        act_edges = get_edges(r, c)
        keep = act_edges.max(axis=1) < r_ * c
        curr = np.zeros((len(act_edges), 2 * H), np.float32)
        curr[keep] = np.concatenate([fce[table_edges[:, 0]],
                                     fce[table_edges[:, 1]]], axis=1)
        e_feats.append(curr)
        e_mask.append(np.where(keep, 0, 2).astype(np.int32))
        e_labels.append(create_edge_labels(act_edges, x["edge_list"]))

    return (np.concatenate(rc_feats, axis=0).astype(np.float32),
            np.asarray(rc_mask, np.int32),
            np.concatenate(e_feats, axis=0).astype(np.float32),
            np.concatenate(e_mask),
            np.asarray(rc_labels, np.int32),
            np.concatenate(e_labels).astype(np.int32))


# ----------------------------------------------------------------------------
# Forward (eval mode): everything downstream of the TAPAS encoder output `h`
# ----------------------------------------------------------------------------
def tapas_baseline_forward(h, examples, fused_params):
    H = h.shape[-1]
    k_pad = fused_params["k_pad"]
    assert k_pad >= 2 * H

    h_np = np.asarray(h, dtype=np.float32)
    rc_x, rc_m, e_x, e_m, rc_labels_np, e_labels_np = _assemble_host(h_np, examples)
    n_rc, n_e = rc_x.shape[0], e_x.shape[0]

    # Row bucketing: rc segment then edge segment, each padded to a tile multiple.
    tm = _pick_tm(n_rc + n_e)
    n_rc_pad = _round_up(n_rc, tm)
    n_e_pad = _round_up(n_e, tm)
    n_pad = n_rc_pad + n_e_pad

    # One packed activation slab (features padded only to the common K = 2*H).
    x_all = np.zeros((n_pad, k_pad), np.float32)
    x_all[:n_rc, :H] = rc_x
    x_all[n_rc_pad:n_rc_pad + n_e, :2 * H] = e_x
    x_all = x_all.astype(jnp.bfloat16)                 # bf16 cast on host, once

    mask_all = np.zeros((n_pad, 1), np.int32)
    mask_all[:n_rc, 0] = rc_m
    mask_all[n_rc_pad:n_rc_pad + n_e, 0] = e_m

    head_ids = np.array([0] * (n_rc_pad // tm) + [1] * (n_e_pad // tm), np.int32)

    # --- Pallas hot path: ONE launch for both MLP heads + masking epilogue ---
    out = _fused_heads(jnp.asarray(head_ids), jnp.asarray(x_all),
                       jnp.asarray(mask_all),
                       fused_params["w1"], fused_params["b1"],
                       fused_params["w2"], fused_params["b2"], tm=tm)

    row_col_gid_logits = out[:n_rc, :4].astype(jnp.float32)               # (N_rc, 4)
    edge_logits = out[n_rc_pad:n_rc_pad + n_e, 0].astype(jnp.float32)     # (N_e,)

    batch_row_col_gid_labels = jnp.asarray(rc_labels_np)
    batch_edge_labels = jnp.asarray(e_labels_np)
    assert batch_row_col_gid_labels.shape[0] == row_col_gid_logits.shape[0]
    assert batch_edge_labels.shape[0] == edge_logits.shape[0]

    # eval-mode return
    return ((row_col_gid_logits, batch_row_col_gid_labels),
            (edge_logits, batch_edge_labels))


# ----------------------------------------------------------------------------
# f32 (un-fused) reference of one head: Linear -> BatchNorm1d(eval) -> ReLU -> Linear
# ----------------------------------------------------------------------------
def _ref_head_f32(x, raw):
    y = x @ np.asarray(raw["w1"]) + np.asarray(raw["b1"])
    scale = np.asarray(raw["gamma"]) / np.sqrt(np.asarray(raw["var"]) + _BN_EPS)
    y = (y - np.asarray(raw["mean"])) * scale + np.asarray(raw["beta"])
    y = np.maximum(y, 0.0)
    return y @ np.asarray(raw["w2"]) + np.asarray(raw["b2"])


# ----------------------------------------------------------------------------
if __name__ == "__main__":
    key = jax.random.PRNGKey(0)
    k_h, k_comp, k_edge = jax.random.split(key, 3)

    B, S, H = 2, 24, 32          # batch, seq len, encoder hidden size (small)

    # synthetic "encoder last_hidden_state"
    h = jax.random.normal(k_h, (B, S, H), jnp.float32)

    examples = [
        {   # table 0: 3x2, all rows survived tokenization (r_ = 3)
            "num_rows": 3, "num_cols": 2,
            "first_cell_idxs": [2, 5, 8, 11, 14, 17],
            "edge_list": [(0, 1), (1, 0), (2, 3), (0, 2)],
            "row_label": [0, 1, 2], "col_label": [1, 3],
        },
        {   # table 1: 3x2, one row dropped by truncation (r_ = 2)
            "num_rows": 3, "num_cols": 2,
            "first_cell_idxs": [3, 6, 9, 12],
            "edge_list": [(0, 1), (2, 3), (1, 3)],
            "row_label": [2, 0, 1], "col_label": [3, 2],
        },
    ]

    comp_raw = init_head_params(k_comp, H, 256, 4)        # comp_and_gid_layer
    edge_raw = init_head_params(k_edge, 2 * H, 256, 1)    # edge_layer
    fused_params = prepare_fused_params(comp_raw, edge_raw)

    (rc_logits, rc_labels), (e_logits, e_labels) = tapas_baseline_forward(
        h, examples, fused_params)

    jax.block_until_ready(rc_logits)
    jax.block_until_ready(e_logits)

    # shape checks
    assert rc_logits.shape == (10, 4) and rc_labels.shape == (10,)
    n_edges = sum(x["num_rows"] * x["num_cols"] *
                  (x["num_rows"] + x["num_cols"] - 1) for x in examples)
    assert e_logits.shape == (n_edges,) and e_labels.shape == (n_edges,)

    # numerical check against a straight f32 reference of both heads
    h_np = np.asarray(h, dtype=np.float32)
    rc_x, rc_m, e_x, e_m, _, _ = _assemble_host(h_np, examples)
    ref_rc = _ref_head_f32(rc_x, comp_raw)
    ref_rc[rc_m == 1, 0] = 1.0
    ref_rc[rc_m == 1, 1:] = 0.0
    ref_e = _ref_head_f32(e_x, edge_raw)[:, 0]
    ref_e[e_m == 2] = -np.inf
    assert np.allclose(np.asarray(rc_logits), ref_rc[:, :4], rtol=5e-2, atol=5e-2)
    assert np.allclose(np.asarray(e_logits), ref_e, rtol=5e-2, atol=5e-2)

    print("KERNEL_OK")
</pallas_src>

<mosaic_0001>
module attributes {stable_mosaic.version = 11 : i64} {
  func.func @fused_head_kernel(%arg0: i32, %arg1: memref<2xi32, #tpu.memory_space<smem>>, %arg2: memref<128x64xbf16, #tpu.memory_space<vmem>>, %arg3: memref<128x1xi32, #tpu.memory_space<vmem>>, %arg4: memref<1x64x256xbf16, #tpu.memory_space<vmem>>, %arg5: memref<1x1x256xf32, #tpu.memory_space<vmem>>, %arg6: memref<1x256x128xbf16, #tpu.memory_space<vmem>>, %arg7: memref<1x1x128xf32, #tpu.memory_space<vmem>>, %arg8: memref<128x128xbf16, #tpu.memory_space<vmem>>) attributes {dimension_semantics = [#tpu.dimension_semantics<parallel>], iteration_bounds = array<i64: 2>, scalar_prefetch = 1 : i64, scratch_operands = 0 : i64, tpu.core_type = #tpu.core_type<tc>, window_params = [{transform_indices = @transform_0, window_bounds = array<i64: 128, 64>}, {transform_indices = @transform_1, window_bounds = array<i64: 128, 1>}, {transform_indices = @transform_2, window_bounds = array<i64: 1, 64, 256>}, {transform_indices = @transform_3, window_bounds = array<i64: 1, 1, 256>}, {transform_indices = @transform_4, window_bounds = array<i64: 1, 256, 128>}, {transform_indices = @transform_5, window_bounds = array<i64: 1, 1, 128>}, {transform_indices = @transform_6, window_bounds = array<i64: 128, 128>}]} {
    %c0 = arith.constant 0 : index
    %c0_0 = arith.constant 0 : index
    %0 = vector.load %arg2[%c0, %c0_0] : memref<128x64xbf16, #tpu.memory_space<vmem>>, vector<128x64xbf16>
    %cst = arith.constant 0.000000e+00 : f32
    %1 = vector.broadcast %cst : f32 to vector<128x128xf32>
    %c0_1 = arith.constant 0 : index
    %c0_2 = arith.constant 0 : index
    %c0_3 = arith.constant 0 : index
    %2 = vector.load %arg4[%c0_1, %c0_2, %c0_3] : memref<1x64x256xbf16, #tpu.memory_space<vmem>>, vector<1x64x128xbf16>
    %3 = vector.shape_cast %2 : vector<1x64x128xbf16> to vector<64x128xbf16>
    %cst_4 = arith.constant dense<0.000000e+00> : vector<128x128xf32>
    %4 = tpu.matmul %0, %3, %cst_4 {dimension_numbers = #tpu.dot_dimension_numbers<[1], [0], [0], [1], [0, 0, 1, 1], [], []>} : vector<128x64xbf16>, vector<64x128xbf16>, vector<128x128xf32> -> vector<128x128xf32>
    %c0_5 = arith.constant 0 : index
    %c0_6 = arith.constant 0 : index
    %c0_7 = arith.constant 0 : index
    %5 = vector.load %arg5[%c0_5, %c0_6, %c0_7] : memref<1x1x256xf32, #tpu.memory_space<vmem>>, vector<1x1x128xf32>
    %6 = vector.shape_cast %5 : vector<1x1x128xf32> to vector<1x128xf32>
    %7 = vector.broadcast %6 : vector<1x128xf32> to vector<128x128xf32>
    %8 = arith.addf %4, %7 : vector<128x128xf32>
    %cst_8 = arith.constant 0.000000e+00 : f32
    %9 = vector.broadcast %cst_8 : f32 to vector<128x128xf32>
    %10 = arith.maximumf %8, %9 : vector<128x128xf32>
    %11 = arith.truncf %10 : vector<128x128xf32> to vector<128x128xbf16>
    %c0_9 = arith.constant 0 : index
    %c0_10 = arith.constant 0 : index
    %c0_11 = arith.constant 0 : index
    %12 = vector.load %arg6[%c0_9, %c0_10, %c0_11] : memref<1x256x128xbf16, #tpu.memory_space<vmem>>, vector<1x128x128xbf16>
    %13 = vector.shape_cast %12 : vector<1x128x128xbf16> to vector<128x128xbf16>
    %cst_12 = arith.constant dense<0.000000e+00> : vector<128x128xf32>
    %14 = tpu.matmul %11, %13, %cst_12 {dimension_numbers = #tpu.dot_dimension_numbers<[1], [0], [0], [1], [0, 0, 1, 1], [], []>} : vector<128x128xbf16>, vector<128x128xbf16>, vector<128x128xf32> -> vector<128x128xf32>
    %15 = arith.addf %1, %14 : vector<128x128xf32>
    %c0_13 = arith.constant 0 : index
    %c0_14 = arith.constant 0 : index
    %c128 = arith.constant 128 : index
    %16 = vector.load %arg4[%c0_13, %c0_14, %c128] : memref<1x64x256xbf16, #tpu.memory_space<vmem>>, vector<1x64x128xbf16>
    %17 = vector.shape_cast %16 : vector<1x64x128xbf16> to vector<64x128xbf16>
    %cst_15 = arith.constant dense<0.000000e+00> : vector<128x128xf32>
    %18 = tpu.matmul %0, %17, %cst_15 {dimension_numbers = #tpu.dot_dimension_numbers<[1], [0], [0], [1], [0, 0, 1, 1], [], []>} : vector<128x64xbf16>, vector<64x128xbf16>, vector<128x128xf32> -> vector<128x128xf32>
    %c0_16 = arith.constant 0 : index
    %c0_17 = arith.constant 0 : index
    %c128_18 = arith.constant 128 : index
    %19 = vector.load %arg5[%c0_16, %c0_17, %c128_18] : memref<1x1x256xf32, #tpu.memory_space<vmem>>, vector<1x1x128xf32>
    %20 = vector.shape_cast %19 : vector<1x1x128xf32> to vector<1x128xf32>
    %21 = vector.broadcast %20 : vector<1x128xf32> to vector<128x128xf32>
    %22 = arith.addf %18, %21 : vector<128x128xf32>
    %cst_19 = arith.constant 0.000000e+00 : f32
    %23 = vector.broadcast %cst_19 : f32 to vector<128x128xf32>
    %24 = arith.maximumf %22, %23 : vector<128x128xf32>
    %25 = arith.truncf %24 : vector<128x128xf32> to vector<128x128xbf16>
    %c0_20 = arith.constant 0 : index
    %c128_21 = arith.constant 128 : index
    %c0_22 = arith.constant 0 : index
    %26 = vector.load %arg6[%c0_20, %c128_21, %c0_22] : memref<1x256x128xbf16, #tpu.memory_space<vmem>>, vector<1x128x128xbf16>
    %27 = vector.shape_cast %26 : vector<1x128x128xbf16> to vector<128x128xbf16>
    %cst_23 = arith.constant dense<0.000000e+00> : vector<128x128xf32>
    %28 = tpu.matmul %25, %27, %cst_23 {dimension_numbers = #tpu.dot_dimension_numbers<[1], [0], [0], [1], [0, 0, 1, 1], [], []>} : vector<128x128xbf16>, vector<128x128xbf16>, vector<128x128xf32> -> vector<128x128xf32>
    %29 = arith.addf %15, %28 : vector<128x128xf32>
    %c0_24 = arith.constant 0 : index
    %c0_25 = arith.constant 0 : index
    %c0_26 = arith.constant 0 : index
    %30 = vector.load %arg7[%c0_24, %c0_25, %c0_26] : memref<1x1x128xf32, #tpu.memory_space<vmem>>, vector<1x1x128xf32>
    %31 = vector.shape_cast %30 : vector<1x1x128xf32> to vector<1x128xf32>
    %32 = vector.broadcast %31 : vector<1x128xf32> to vector<128x128xf32>
    %33 = arith.addf %29, %32 : vector<128x128xf32>
    %c0_27 = arith.constant 0 : index
    %c0_28 = arith.constant 0 : index
    %34 = vector.load %arg3[%c0_27, %c0_28] : memref<128x1xi32, #tpu.memory_space<vmem>>, vector<128x1xi32>
    %35 = tpu.iota {dimensions = array<i32: 1>} : vector<128x128xi32>
    %c0_i32 = arith.constant 0 : i32
    %36 = vector.broadcast %c0_i32 : i32 to vector<128x128xi32>
    %37 = arith.cmpi eq, %35, %36 : vector<128x128xi32>
    %cst_29 = arith.constant 1.000000e+00 : f32
    %cst_30 = arith.constant 0.000000e+00 : f32
    %38 = vector.broadcast %cst_29 : f32 to vector<128x128xf32>
    %39 = vector.broadcast %cst_30 : f32 to vector<128x128xf32>
    %40 = arith.select %37, %38, %39 : vector<128x128xi1>, vector<128x128xf32>
    %c1_i32 = arith.constant 1 : i32
    %41 = vector.broadcast %c1_i32 : i32 to vector<128x1xi32>
    %42 = arith.cmpi eq, %34, %41 : vector<128x1xi32>
    %43 = vector.shape_cast %42 : vector<128x1xi1> to vector<128x1xi1>
    %44 = vector.broadcast %43 : vector<128x1xi1> to vector<128x128xi1>
    %45 = arith.select %44, %40, %33 : vector<128x128xi1>, vector<128x128xf32>
    %c2_i32 = arith.constant 2 : i32
    %46 = vector.broadcast %c2_i32 : i32 to vector<128x1xi32>
    %47 = arith.cmpi eq, %34, %46 : vector<128x1xi32>
    %cst_31 = arith.constant 0xFF800000 : f32
    %48 = vector.shape_cast %47 : vector<128x1xi1> to vector<128x1xi1>
    %49 = vector.broadcast %48 : vector<128x1xi1> to vector<128x128xi1>
    %50 = vector.broadcast %cst_31 : f32 to vector<128x128xf32>
    %51 = arith.select %49, %50, %45 : vector<128x128xi1>, vector<128x128xf32>
    %52 = arith.truncf %51 : vector<128x128xf32> to vector<128x128xbf16>
    %c0_32 = arith.constant 0 : index
    %c0_33 = arith.constant 0 : index
    %53 = vector.load %arg8[%c0_32, %c0_33] : memref<128x128xbf16, #tpu.memory_space<vmem>>, vector<128x128xbf16>
    tpu.vector_store %arg8[%c0_32, %c0_33], %52 {strides = array<i32>} : memref<128x128xbf16, #tpu.memory_space<vmem>>, vector<128x128xbf16>,
    return
  }
  func.func @transform_0(%arg0: i32, %arg1: memref<2xi32, #tpu.memory_space<smem>>) -> (i32, i32) {
    %c0_i32 = arith.constant 0 : i32
    %c0_i32_0 = arith.constant 0 : i32
    return %arg0, %c0_i32 : i32, i32
  }
  func.func @transform_1(%arg0: i32, %arg1: memref<2xi32, #tpu.memory_space<smem>>) -> (i32, i32) {
    %c0_i32 = arith.constant 0 : i32
    %c0_i32_0 = arith.constant 0 : i32
    return %arg0, %c0_i32 : i32, i32
  }
  func.func @transform_2(%arg0: i32, %arg1: memref<2xi32, #tpu.memory_space<smem>>) -> (i32, i32, i32) {
    %0 = arith.index_cast %arg0 : i32 to index
    %1 = memref.load %arg1[%0] : memref<2xi32, #tpu.memory_space<smem>>
    %c0_i32 = arith.constant 0 : i32
    %c0_i32_0 = arith.constant 0 : i32
    %c0_i32_1 = arith.constant 0 : i32
    return %1, %c0_i32, %c0_i32_0 : i32, i32, i32
  }
  func.func @transform_3(%arg0: i32, %arg1: memref<2xi32, #tpu.memory_space<smem>>) -> (i32, i32, i32) {
    %0 = arith.index_cast %arg0 : i32 to index
    %1 = memref.load %arg1[%0] : memref<2xi32, #tpu.memory_space<smem>>
    %c0_i32 = arith.constant 0 : i32
    %c0_i32_0 = arith.constant 0 : i32
    %c0_i32_1 = arith.constant 0 : i32
    return %1, %c0_i32, %c0_i32_0 : i32, i32, i32
  }
  func.func @transform_4(%arg0: i32, %arg1: memref<2xi32, #tpu.memory_space<smem>>) -> (i32, i32, i32) {
    %0 = arith.index_cast %arg0 : i32 to index
    %1 = memref.load %arg1[%0] : memref<2xi32, #tpu.memory_space<smem>>
    %c0_i32 = arith.constant 0 : i32
    %c0_i32_0 = arith.constant 0 : i32
    %c0_i32_1 = arith.constant 0 : i32
    return %1, %c0_i32, %c0_i32_0 : i32, i32, i32
  }
  func.func @transform_5(%arg0: i32, %arg1: memref<2xi32, #tpu.memory_space<smem>>) -> (i32, i32, i32) {
    %0 = arith.index_cast %arg0 : i32 to index
    %1 = memref.load %arg1[%0] : memref<2xi32, #tpu.memory_space<smem>>
    %c0_i32 = arith.constant 0 : i32
    %c0_i32_0 = arith.constant 0 : i32
    %c0_i32_1 = arith.constant 0 : i32
    return %1, %c0_i32, %c0_i32_0 : i32, i32, i32
  }
  func.func @transform_6(%arg0: i32, %arg1: memref<2xi32, #tpu.memory_space<smem>>) -> (i32, i32) {
    %c0_i32 = arith.constant 0 : i32
    %c0_i32_0 = arith.constant 0 : i32
    return %arg0, %c0_i32 : i32, i32
  }
}

</mosaic_0001>

<llo_original>
// kernel: _fused_heads.1
$region0: #{_fused_heads.1}
  #allocation0 [shape = 'u32[]', space=smem, size = 0x4, offset = 0x4, fixed_abs, tag = 'smem constant byte address 0x4 - core index']
  #allocation1 [shape = 'u32[144,128]{1,0:T(1,128)}', space=vmem, size = 0x12000, scoped, tag = 'internal scratch']
  #allocation2 [shape = 's32[1]{0}', space=sflag, size = 0x4, scoped, tag = 'scoped memory for _fused_heads.1']
  #allocation3 [shape = 'u8[512]{0}', space=smem, size = 0x200, scoped, tag = 'prefetched SMEM operand 0']
  %s0 = inlined_call_operand.vmem [shape: s32[2], index: 0, kind: input, shape index: {}]
  %s1 = inlined_call_operand.vmem [shape: bf16[256,64], index: 1, kind: input, shape index: {}]
  %s2 = inlined_call_operand.vmem [shape: s32[256,1], index: 2, kind: input, shape index: {}]
  %s3 = inlined_call_operand.vmem [shape: bf16[2,64,256], index: 3, kind: input, shape index: {}]
  %s4 = inlined_call_operand.vmem [shape: f32[2,1,256], index: 4, kind: input, shape index: {}]
  %s5 = inlined_call_operand.vmem [shape: bf16[2,256,128], index: 5, kind: input, shape index: {}]
  %s6 = inlined_call_operand.vmem [shape: f32[2,1,128], index: 6, kind: input, shape index: {}]
  %s7 = inlined_call_operand.hbm [shape: bf16[256,128], index: 7, kind: output, shape index: {}]
  %s8 = sld [smem:[#allocation0]]
  $region57: #{_fused_heads.1} parent=0
    _
  %s10 = ssub.s32 1, %s8
  %s11 = scalar_select 0, %s10, %s8
  %s12 = sshll.u32 %s0, 4
  %s13 = int_to_ptr.vmem [resolvable:$true] %s12
  %15 = dma.vmem_to_smem %s13, 16, [#allocation3], [#allocation2]
  %16 = dma.done [#allocation2], 16
  %17 = sfence
  $region1: #{_fused_heads.1} parent=0
    #allocation4 [shape = 'u8[65536]{0}', space=vmem, size = 0x10000, scoped, tag = 'output window, operand 0']
    #allocation5 [shape = 's32[2]{0}', space=sflag, size = 0x8, scoped, tag = 'scoped memory for _fused_heads.1']
    %18 = vsyncpa [#allocation5], 0
    %s19 = scalar_lea.sflag [#allocation5], 1
    %20 = vsyncpa %s19, 0
    loop: start=0, step=1, limit=4
    $region2: #{_fused_heads.1} parent=1 // loop_pre_header
      _
    $region3: #{_fused_heads.1} parent=1 // loop_header
      %s22 = sphi 0, %s26
      %p23 = scmp.ge.s32.totalorder %s22, 4
      %s32 = sphi 0, %s34
      %s35 = sphi 0, %s32
      %s36 = sphi 0, %s35
      %s52 = sphi 0, %s36
      %s58 = sphi 0, %s60
      %s61 = sphi 0, %s58
      %s62 = sphi 0, %s61
      %s78 = sphi 0, %s62
      %s86 = sphi 0, %s88
      %s89 = sphi 0, %s86
      %s90 = sphi 0, %s89
      %s106 = sphi 0, %s90
      %s114 = sphi 0, %s116
      %s117 = sphi 0, %s114
      %s118 = sphi 0, %s117
      %s134 = sphi 0, %s118
      %s142 = sphi 0, %s144
      %s145 = sphi 0, %s142
      %s146 = sphi 0, %s145
      %s162 = sphi 0, %s146
      %s170 = sphi 0, %s172
      %s173 = sphi 0, %s170
      %s174 = sphi 0, %s173
      %s190 = sphi 0, %s174
      %s196 = sphi 0, %s198
      %s199 = sphi 0, %s196
      %s200 = sphi 0, %s199
      %s216 = sphi 0, %s200
    $region4: #{_fused_heads.1} parent=1 // loop_header_branch
      %25 = sbr.rel (%p23) target = $region8
    $region5: #{_fused_heads.1} parent=1 // loop_body
      %s27 = ssub.s32 %s22, 1
      %s28 = ssub.s32 %s22, 2
      %s29 = sadd.s32 %s22, 1
      %s30 = ssub.s32 %s22, %s29
      %p31 = scmp.eq.s32.totalorder %s30, 0
      %s33 = sadd.s32 %s32, 1
      %s34 = scalar_select %p31, %s32, %s33
      %p37 = pneg %p31
      %p38 = scmp.eq.s32.totalorder %s22, 1
      %p39 = por %p37, %p38
      %p40 = scmp.ne.s32.totalorder %s32, %s35
      %p41 = scmp.eq.s32.totalorder %s22, 0
      %p42 = por %p40, %p41
      %p43 = scmp.ne.s32.totalorder %s32, %s35
      %p44 = scmp.eq.s32.totalorder %s27, 1
      %p45 = por %p43, %p44
      %p46 = scmp.ne.s32.totalorder %s35, %s36
      %p47 = scmp.eq.s32.totalorder %s27, 0
      %p48 = por %p46, %p47
      %p49 = scmp.ne.s32.totalorder %s35, %s36
      %p50 = scmp.eq.s32.totalorder %s28, 1
      %p51 = por %p49, %p50
      %p53 = scmp.ne.s32.totalorder %s36, %s52
      %p54 = scmp.eq.s32.totalorder %s28, 0
      %p55 = por %p53, %p54
      %s56 = ssub.s32 %s22, %s29
      %p57 = scmp.eq.s32.totalorder %s56, 0
      %s59 = sadd.s32 %s58, 1
      %s60 = scalar_select %p57, %s58, %s59
      %p63 = pneg %p57
      %p64 = scmp.eq.s32.totalorder %s22, 1
      %p65 = por %p63, %p64
      %p66 = scmp.ne.s32.totalorder %s58, %s61
      %p67 = scmp.eq.s32.totalorder %s22, 0
      %p68 = por %p66, %p67
      %p69 = scmp.ne.s32.totalorder %s58, %s61
      %p70 = scmp.eq.s32.totalorder %s27, 1
      %p71 = por %p69, %p70
      %p72 = scmp.ne.s32.totalorder %s61, %s62
      %p73 = scmp.eq.s32.totalorder %s27, 0
      %p74 = por %p72, %p73
      %p75 = scmp.ne.s32.totalorder %s61, %s62
      %p76 = scmp.eq.s32.totalorder %s28, 1
      %p77 = por %p75, %p76
      %p79 = scmp.ne.s32.totalorder %s62, %s78
      %p80 = scmp.eq.s32.totalorder %s28, 0
      %p81 = por %p79, %p80
      %s82 = sld [smem:[#allocation3 + %s22]]
      %s83 = sld [smem:[#allocation3 + %s29]]
      %s84 = ssub.s32 %s82, %s83
      %p85 = scmp.eq.s32.totalorder %s84, 0
      %s87 = sadd.s32 %s86, 1
      %s88 = scalar_select %p85, %s86, %s87
      %p91 = pneg %p85
      %p92 = scmp.eq.s32.totalorder %s22, 1
      %p93 = por %p91, %p92
      %p94 = scmp.ne.s32.totalorder %s86, %s89
      %p95 = scmp.eq.s32.totalorder %s22, 0
      %p96 = por %p94, %p95
      %p97 = scmp.ne.s32.totalorder %s86, %s89
      %p98 = scmp.eq.s32.totalorder %s27, 1
      %p99 = por %p97, %p98
      %p100 = scmp.ne.s32.totalorder %s89, %s90
      %p101 = scmp.eq.s32.totalorder %s27, 0
      %p102 = por %p100, %p101
      %p103 = scmp.ne.s32.totalorder %s89, %s90
      %p104 = scmp.eq.s32.totalorder %s28, 1
      %p105 = por %p103, %p104
      %p107 = scmp.ne.s32.totalorder %s90, %s106
      %p108 = scmp.eq.s32.totalorder %s28, 0
      %p109 = por %p107, %p108
      %s110 = sld [smem:[#allocation3 + %s22]]
      %s111 = sld [smem:[#allocation3 + %s29]]
      %s112 = ssub.s32 %s110, %s111
      %p113 = scmp.eq.s32.totalorder %s112, 0
      %s115 = sadd.s32 %s114, 1
      %s116 = scalar_select %p113, %s114, %s115
      %p119 = pneg %p113
      %p120 = scmp.eq.s32.totalorder %s22, 1
      %p121 = por %p119, %p120
      %p122 = scmp.ne.s32.totalorder %s114, %s117
      %p123 = scmp.eq.s32.totalorder %s22, 0
      %p124 = por %p122, %p123
      %p125 = scmp.ne.s32.totalorder %s114, %s117
      %p126 = scmp.eq.s32.totalorder %s27, 1
      %p127 = por %p125, %p126
      %p128 = scmp.ne.s32.totalorder %s117, %s118
      %p129 = scmp.eq.s32.totalorder %s27, 0
      %p130 = por %p128, %p129
      %p131 = scmp.ne.s32.totalorder %s117, %s118
      %p132 = scmp.eq.s32.totalorder %s28, 1
      %p133 = por %p131, %p132
      %p135 = scmp.ne.s32.totalorder %s118, %s134
      %p136 = scmp.eq.s32.totalorder %s28, 0
      %p137 = por %p135, %p136
      %s138 = sld [smem:[#allocation3 + %s22]]
      %s139 = sld [smem:[#allocation3 + %s29]]
      %s140 = ssub.s32 %s138, %s139
      %p141 = scmp.eq.s32.totalorder %s140, 0
      %s143 = sadd.s32 %s142, 1
      %s144 = scalar_select %p141, %s142, %s143
      %p147 = pneg %p141
      %p148 = scmp.eq.s32.totalorder %s22, 1
      %p149 = por %p147, %p148
      %p150 = scmp.ne.s32.totalorder %s142, %s145
      %p151 = scmp.eq.s32.totalorder %s22, 0
      %p152 = por %p150, %p151
      %p153 = scmp.ne.s32.totalorder %s142, %s145
      %p154 = scmp.eq.s32.totalorder %s27, 1
      %p155 = por %p153, %p154
      %p156 = scmp.ne.s32.totalorder %s145, %s146
      %p157 = scmp.eq.s32.totalorder %s27, 0
      %p158 = por %p156, %p157
      %p159 = scmp.ne.s32.totalorder %s145, %s146
      %p160 = scmp.eq.s32.totalorder %s28, 1
      %p161 = por %p159, %p160
      %p163 = scmp.ne.s32.totalorder %s146, %s162
      %p164 = scmp.eq.s32.totalorder %s28, 0
      %p165 = por %p163, %p164
      %s166 = sld [smem:[#allocation3 + %s22]]
      %s167 = sld [smem:[#allocation3 + %s29]]
      %s168 = ssub.s32 %s166, %s167
      %p169 = scmp.eq.s32.totalorder %s168, 0
      %s171 = sadd.s32 %s170, 1
      %s172 = scalar_select %p169, %s170, %s171
      %p175 = pneg %p169
      %p176 = scmp.eq.s32.totalorder %s22, 1
      %p177 = por %p175, %p176
      %p178 = scmp.ne.s32.totalorder %s170, %s173
      %p179 = scmp.eq.s32.totalorder %s22, 0
      %p180 = por %p178, %p179
      %p181 = scmp.ne.s32.totalorder %s170, %s173
      %p182 = scmp.eq.s32.totalorder %s27, 1
      %p183 = por %p181, %p182
      %p184 = scmp.ne.s32.totalorder %s173, %s174
      %p185 = scmp.eq.s32.totalorder %s27, 0
      %p186 = por %p184, %p185
      %p187 = scmp.ne.s32.totalorder %s173, %s174
      %p188 = scmp.eq.s32.totalorder %s28, 1
      %p189 = por %p187, %p188
      %p191 = scmp.ne.s32.totalorder %s174, %s190
      %p192 = scmp.eq.s32.totalorder %s28, 0
      %p193 = por %p191, %p192
      %s194 = ssub.s32 %s22, %s29
      %p195 = scmp.eq.s32.totalorder %s194, 0
      %s197 = sadd.s32 %s196, 1
      %s198 = scalar_select %p195, %s196, %s197
      %p201 = pneg %p195
      %p202 = scmp.eq.s32.totalorder %s22, 1
      %p203 = por %p201, %p202
      %p204 = scmp.ne.s32.totalorder %s196, %s199
      %p205 = scmp.eq.s32.totalorder %s22, 0
      %p206 = por %p204, %p205
      %p207 = scmp.ne.s32.totalorder %s196, %s199
      %p208 = scmp.eq.s32.totalorder %s27, 1
      %p209 = por %p207, %p208
      %p210 = scmp.ne.s32.totalorder %s199, %s200
      %p211 = scmp.eq.s32.totalorder %s27, 0
      %p212 = por %p210, %p211
      %p213 = scmp.ne.s32.totalorder %s199, %s200
      %p214 = scmp.eq.s32.totalorder %s28, 1
      %p215 = por %p213, %p214
      %p217 = scmp.ne.s32.totalorder %s200, %s216
      %p218 = scmp.eq.s32.totalorder %s28, 0
      %p219 = por %p217, %p218
      %p220 = scmp.le.s32.totalorder 1, %s22
      %p221 = scmp.lt.s32.totalorder %s22, 3
      %p222 = pnand %p220, %p221
      %p223 = pneg %p222
      // Predicated region
      $region9: #{_fused_heads.1} parent=5 // pred_check
        _
      $region10: #{_fused_heads.1} parent=5 // pred_check_branch
        %225 = sbr.rel (%p222) target = $region12
      $region11: #{_fused_heads.1} parent=5 // pred_region
        %s226 = ssub.s32 %s22, 1
      $region12: #{_fused_heads.1} parent=5 // pred_fallthru
        _
      %p227 = scmp.lt.s32.totalorder %s22, 2
      // Predicated region
      $region13: #{_fused_heads.1} parent=5 // pred_check
        %p228 = pneg %p227
      $region14: #{_fused_heads.1} parent=5 // pred_check_branch
        %230 = sbr.rel (%p228) target = $region16
      $region15: #{_fused_heads.1} parent=5 // pred_region
        // Predicated region
        $region17: #{_fused_heads.1} parent=15 // pred_check
          %p231 = pneg %p42
        $region18: #{_fused_heads.1} parent=15 // pred_check_branch
          %233 = sbr.rel (%p231) target = $region20
        $region19: #{_fused_heads.1} parent=15 // pred_region
          %s234 = smul.u32 16, %s22
          %p235 = scmp.lt.s32.totalorder %s234, 31
          %s236 = scalar_select %p235, %s234, 31
          %s237 = smul.addr %s236, 4
          %s238 = scalar_lea.vmem %s1, %s237
          %s239 = smul.u32 16, %s22
        $region20: #{_fused_heads.1} parent=15 // pred_fallthru
          _
        // Predicated region
        $region21: #{_fused_heads.1} parent=15 // pred_check
          %p240 = pneg %p68
        $region22: #{_fused_heads.1} parent=15 // pred_check_branch
          %242 = sbr.rel (%p240) target = $region24
        $region23: #{_fused_heads.1} parent=15 // pred_region
          %s243 = smul.u32 16, %s22
          %p244 = scmp.lt.s32.totalorder %s243, 31
          %s245 = scalar_select %p244, %s243, 31
          %s246 = smul.addr %s245, 8
          %s247 = scalar_lea.vmem %s2, %s246
          %s248 = smul.u32 16, %s22
        $region24: #{_fused_heads.1} parent=15 // pred_fallthru
          _
        // Predicated region
        $region25: #{_fused_heads.1} parent=15 // pred_check
          %p249 = pneg %p96
        $region26: #{_fused_heads.1} parent=15 // pred_check_branch
          %251 = sbr.rel (%p249) target = $region28
        $region27: #{_fused_heads.1} parent=15 // pred_region
          %s252 = sld [smem:[#allocation3 + %s22]]
          %p253 = scmp.lt.s32.totalorder %s252, 1
          %s254 = scalar_select %p253, %s252, 1
          %s255 = smul.addr %s254, 16
          %s256 = smul.addr %s255, 4
          %s257 = scalar_lea.vmem %s3, %s256
          %s258 = sld [smem:[#allocation3 + %s22]]
        $region28: #{_fused_heads.1} parent=15 // pred_fallthru
          _
        // Predicated region
        $region29: #{_fused_heads.1} parent=15 // pred_check
          %p259 = pneg %p124
        $region30: #{_fused_heads.1} parent=15 // pred_check_branch
          %261 = sbr.rel (%p259) target = $region32
        $region31: #{_fused_heads.1} parent=15 // pred_region
          %s262 = sld [smem:[#allocation3 + %s22]]
          %p263 = scmp.lt.s32.totalorder %s262, 1
          %s264 = scalar_select %p263, %s262, 1
          %s265 = smul.addr %s264, 2
          %s266 = scalar_lea.vmem %s4, %s265
          %s267 = sld [smem:[#allocation3 + %s22]]
        $region32: #{_fused_heads.1} parent=15 // pred_fallthru
          _
        // Predicated region
        $region33: #{_fused_heads.1} parent=15 // pred_check
          %p268 = pneg %p152
        $region34: #{_fused_heads.1} parent=15 // pred_check_branch
          %270 = sbr.rel (%p268) target = $region36
        $region35: #{_fused_heads.1} parent=15 // pred_region
          %s271 = sld [smem:[#allocation3 + %s22]]
          %p272 = scmp.lt.s32.totalorder %s271, 1
          %s273 = scalar_select %p272, %s271, 1
          %s274 = smul.addr %s273, 32
          %s275 = smul.addr %s274, 4
          %s276 = scalar_lea.vmem %s5, %s275
          %s277 = sld [smem:[#allocation3 + %s22]]
        $region36: #{_fused_heads.1} parent=15 // pred_fallthru
          _
        // Predicated region
        $region37: #{_fused_heads.1} parent=15 // pred_check
          %p278 = pneg %p180
        $region38: #{_fused_heads.1} parent=15 // pred_check_branch
          %280 = sbr.rel (%p278) target = $region40
        $region39: #{_fused_heads.1} parent=15 // pred_region
          %s281 = sld [smem:[#allocation3 + %s22]]
          %p282 = scmp.lt.s32.totalorder %s281, 1
          %s283 = scalar_select %p282, %s281, 1
          %s284 = scalar_lea.vmem %s6, %s283
          %s285 = sld [smem:[#allocation3 + %s22]]
        $region40: #{_fused_heads.1} parent=15 // pred_fallthru
          _
      $region16: #{_fused_heads.1} parent=5 // pred_fallthru
        _
      %p286 = scmp.le.s32.totalorder 1, %s22
      %p287 = scmp.lt.s32.totalorder %s22, 3
      %p288 = pnand %p286, %p287
      %p289 = pneg %p288
      // Predicated region
      $region41: #{_fused_heads.1} parent=5 // pred_check
        _
      $region42: #{_fused_heads.1} parent=5 // pred_check_branch
        %291 = sbr.rel (%p288) target = $region44
      $region43: #{_fused_heads.1} parent=5 // pred_region
        %s292 = ssub.s32 %s22, 1
        %s293 = smul.u32 16, %s27
        %p294 = scmp.lt.s32.totalorder %s293, 31
        %s295 = scalar_select %p294, %s293, 31
        %s296 = smul.addr %s295, 4
        %s297 = scalar_lea.vmem %s1, %s296
        %p298 = pneg %p48
        %p299 = pneg %p45
        %s300 = smul.u32 16, %s27
        %p301 = scmp.lt.s32.totalorder %s300, 31
        %s302 = scalar_select %p301, %s300, 31
        %s303 = smul.addr %s302, 8
        %s304 = scalar_lea.vmem %s2, %s303
        %p305 = pneg %p74
        %p306 = pneg %p71
        %s307 = sld [smem:[#allocation3 + %s27]]
        %p308 = scmp.lt.s32.totalorder %s307, 1
        %s309 = scalar_select %p308, %s307, 1
        %s310 = smul.addr %s309, 16
        %s311 = smul.addr %s310, 4
        %s312 = scalar_lea.vmem %s3, %s311
        %p313 = pneg %p102
        %p314 = pneg %p99
        %s315 = sld [smem:[#allocation3 + %s27]]
        %p316 = scmp.lt.s32.totalorder %s315, 1
        %s317 = scalar_select %p316, %s315, 1
        %s318 = smul.addr %s317, 2
        %s319 = scalar_lea.vmem %s4, %s318
        %p320 = pneg %p130
        %p321 = pneg %p127
        %s322 = sld [smem:[#allocation3 + %s27]]
        %p323 = scmp.lt.s32.totalorder %s322, 1
        %s324 = scalar_select %p323, %s322, 1
        %s325 = smul.addr %s324, 32
        %s326 = smul.addr %s325, 4
        %s327 = scalar_lea.vmem %s5, %s326
        %p328 = pneg %p158
        %p329 = pneg %p155
        %s330 = sld [smem:[#allocation3 + %s27]]
        %p331 = scmp.lt.s32.totalorder %s330, 1
        %s332 = scalar_select %p331, %s330, 1
        %s333 = scalar_lea.vmem %s6, %s332
        %p334 = pneg %p186
        %p335 = pneg %p183
        %p336 = pneg %p212
        %p337 = pneg %p209
        %s338 = sand.u32 %s199, 1
        %s339 = scalar_lea.sflag [#allocation5], %s338
        %s340 = sand.u32 %s199, 1
        %s341 = smul.addr %s340, 64
        %s342 = scalar_lea.vmem [#allocation4], %s341
        %s343 = smul.u32 16, %s27
        %p344 = scmp.lt.s32.totalorder %s343, 31
        %s345 = scalar_select %p344, %s343, 31
        %s346 = smul.addr %s345, 4
        %s347 = scalar_lea.vmem %s1, %s346
        %s348 = smul.u32 16, %s27
        %s349 = smul.u32 16, %s27
        %p350 = scmp.lt.s32.totalorder %s349, 31
        %s351 = scalar_select %p350, %s349, 31
        %s352 = smul.addr %s351, 8
        %s353 = scalar_lea.vmem %s2, %s352
        %s354 = smul.u32 16, %s27
        %s355 = sld [smem:[#allocation3 + %s27]]
        %p356 = scmp.lt.s32.totalorder %s355, 1
        %s357 = scalar_select %p356, %s355, 1
        %s358 = smul.addr %s357, 16
        %s359 = smul.addr %s358, 4
        %s360 = scalar_lea.vmem %s3, %s359
        %s361 = sld [smem:[#allocation3 + %s27]]
        %s362 = sld [smem:[#allocation3 + %s27]]
        %p363 = scmp.lt.s32.totalorder %s362, 1
        %s364 = scalar_select %p363, %s362, 1
        %s365 = smul.addr %s364, 2
        %s366 = scalar_lea.vmem %s4, %s365
        %s367 = sld [smem:[#allocation3 + %s27]]
        %s368 = sld [smem:[#allocation3 + %s27]]
        %p369 = scmp.lt.s32.totalorder %s368, 1
        %s370 = scalar_select %p369, %s368, 1
        %s371 = smul.addr %s370, 32
        %s372 = smul.addr %s371, 4
        %s373 = scalar_lea.vmem %s5, %s372
        %s374 = sld [smem:[#allocation3 + %s27]]
        %s375 = sld [smem:[#allocation3 + %s27]]
        %p376 = scmp.lt.s32.totalorder %s375, 1
        %s377 = scalar_select %p376, %s375, 1
        %s378 = scalar_lea.vmem %s6, %s377
        %s379 = sld [smem:[#allocation3 + %s27]]
        %s380 = smul.u32 16, %s27
        %v382 = vld [vmem:[%s347] sm:$0xf]
        %v383 = vld [vmem:[%s347 + $0x4] sm:$0xf]
        %v384 = vld [vmem:[%s347 + $0x8] sm:$0xf]
        %v385 = vld [vmem:[%s347 + $0xc] sm:$0xf]
        %v386 = vld [vmem:[%s347 + $0x10] sm:$0xf]
        %v387 = vld [vmem:[%s347 + $0x14] sm:$0xf]
        %v388 = vld [vmem:[%s347 + $0x18] sm:$0xf]
        %v389 = vld [vmem:[%s347 + $0x1c] sm:$0xf]
        %v390 = vld [vmem:[%s347 + $0x20] sm:$0xf]
        %v391 = vld [vmem:[%s347 + $0x24] sm:$0xf]
        %v392 = vld [vmem:[%s347 + $0x28] sm:$0xf]
        %v393 = vld [vmem:[%s347 + $0x2c] sm:$0xf]
        %v394 = vld [vmem:[%s347 + $0x30] sm:$0xf]
        %v395 = vld [vmem:[%s347 + $0x34] sm:$0xf]
        %v396 = vld [vmem:[%s347 + $0x38] sm:$0xf]
        %v397 = vld [vmem:[%s347 + $0x3c] sm:$0xf]
        %v398 = vld [vmem:[%s360] sm:$0xf]
        %v399 = vld [vmem:[%s360 + $0x8] sm:$0xf]
        %v400 = vld [vmem:[%s360 + $0x10] sm:$0xf]
        %v401 = vld [vmem:[%s360 + $0x18] sm:$0xf]
        %v402 = vld [vmem:[%s360 + $0x20] sm:$0xf]
        %v403 = vld [vmem:[%s360 + $0x28] sm:$0xf]
        %v404 = vld [vmem:[%s360 + $0x30] sm:$0xf]
        %v405 = vld [vmem:[%s360 + $0x38] sm:$0xf]
        %v406 = vld [vmem:[%s366] sm:$0x1]
        %v408 = vlaneseq
        %v409 = vshrl.u32 %v408, 7
        %v410 = vsub.s32 0, %v409
        %v411 = vrot.slane %v406, %v410
        %v429 = vunpack.c.l.b16 %v382
        %v430 = vunpack.c.l.b16 %v383
        %v431 = vunpack.c.l.b16 %v384
        %v432 = vunpack.c.l.b16 %v385
        %v433 = vunpack.c.l.b16 %v386
        %v434 = vunpack.c.l.b16 %v387
        %v435 = vunpack.c.l.b16 %v388
        %v436 = vunpack.c.l.b16 %v389
        %v437 = vunpack.c.l.b16 %v390
        %v438 = vunpack.c.l.b16 %v391
        %v439 = vunpack.c.l.b16 %v392
        %v440 = vunpack.c.l.b16 %v393
        %v441 = vunpack.c.l.b16 %v394
        %v442 = vunpack.c.l.b16 %v395
        %v443 = vunpack.c.l.b16 %v396
        %v444 = vunpack.c.l.b16 %v397
        %v445 = vpack.c.b16 %v430, %v429
        %v446 = vpack.c.b16 %v432, %v431
        %v447 = vpack.c.b16 %v434, %v433
        %v448 = vpack.c.b16 %v436, %v435
        %v449 = vpack.c.b16 %v438, %v437
        %v450 = vpack.c.b16 %v440, %v439
        %v451 = vpack.c.b16 %v442, %v441
        %v452 = vpack.c.b16 %v444, %v443
        %v461 = vunpack.c.l.b16 %v398
        %v462 = vunpack.c.l.b16 %v399
        %v463 = vunpack.c.l.b16 %v400
        %v464 = vunpack.c.l.b16 %v401
        %v465 = vunpack.c.l.b16 %v402
        %v466 = vunpack.c.l.b16 %v403
        %v467 = vunpack.c.l.b16 %v404
        %v468 = vunpack.c.l.b16 %v405
        %v469 = vpack.c.b16 %v462, %v461
        %v470 = vpack.c.b16 %v464, %v463
        %v471 = vpack.c.b16 %v466, %v465
        %v472 = vpack.c.b16 %v468, %v467
        %vm477 = vcmask 523264
        %v479 = vsel %vm477, %v445, 0
        %v482 = vsel %vm477, %v446, 0
        %v485 = vsel %vm477, %v447, 0
        %v488 = vsel %vm477, %v448, 0
        %v491 = vsel %vm477, %v449, 0
        %v494 = vsel %vm477, %v450, 0
        %v497 = vsel %vm477, %v451, 0
        %v500 = vsel %vm477, %v452, 0
        %502 = vmatprep.subr.bf16.mxu0 0
        %503 = vmatpush1.bf16.msra.mxu0 0
        %504 = vmatprep.subr.bf16.mxu0 0
        %505 = vmatpush1.bf16.msra.mxu0 0
        %506 = vmatprep.subr.bf16.mxu0 0
        %507 = vmatpush1.bf16.msra.mxu0 0
        %508 = vmatprep.subr.bf16.mxu0 0
        %509 = vmatpush1.bf16.msra.mxu0 0
        %510 = vmatprep.subr.bf16.mxu0 0
        %511 = vmatpush1.bf16.msra.mxu0 %v472
        %512 = vmatprep.subr.bf16.mxu0 0
        %513 = vmatpush1.bf16.msra.mxu0 %v471
        %514 = vmatprep.subr.bf16.mxu0 0
        %515 = vmatpush1.bf16.msra.mxu0 %v470
        %516 = vmatprep.subr.bf16.mxu0 0
        %517 = vmatpush1.bf16.msra.mxu0 %v469
        %518 = vmatprep.subr.bf16.mxu0 0
        %519 = vmatpush2.bf16.msra.mxu0 0
        %520 = vmatprep.subr.bf16.mxu0 0
        %521 = vmatpush2.bf16.msra.mxu0 0
        %522 = vmatprep.subr.bf16.mxu0 0
        %523 = vmatpush2.bf16.msra.mxu0 0
        %524 = vmatprep.subr.bf16.mxu0 0
        %525 = vmatpush2.bf16.msra.mxu0 0
        %526 = vmatprep.subr.bf16.mxu0 0
        %527 = vmatpush2.bf16.msra.mxu0 0
        %528 = vmatprep.subr.bf16.mxu0 0
        %529 = vmatpush2.bf16.msra.mxu0 0
        %530 = vmatprep.subr.bf16.mxu0 0
        %531 = vmatpush2.bf16.msra.mxu0 0
        %532 = vmatprep.subr.bf16.mxu0 0
        %533 = vmatpush2.bf16.msra.mxu0 0
        %534 = vmatprep.mubr.bf16.mxu0 0
        %535 = vmatmul.mubr.bf16.gmra.mxu0 %v479
        %v536 = vpop.f32.mrf.mxu0
        %v537 = vadd.f32 %v411, %v536
        %v538 = vpop.f32.mrf.mxu0
        %v539 = vpop.f32.mrf.mxu0
        %v540 = vadd.f32 %v411, %v539
        %v541 = vpop.f32.mrf.mxu0
        %542 = vmatprep.mubr.bf16.mxu0 0
        %543 = vmatmul.mubr.bf16.gmra.mxu0 %v482
        %v544 = vpop.f32.mrf.mxu0
        %v545 = vadd.f32 %v411, %v544
        %v546 = vpop.f32.mrf.mxu0
        %v547 = vpop.f32.mrf.mxu0
        %v548 = vadd.f32 %v411, %v547
        %v549 = vpop.f32.mrf.mxu0
        %550 = vmatprep.mubr.bf16.mxu0 0
        %551 = vmatmul.mubr.bf16.gmra.mxu0 %v485
        %v552 = vpop.f32.mrf.mxu0
        %v553 = vadd.f32 %v411, %v552
        %v554 = vpop.f32.mrf.mxu0
        %v555 = vpop.f32.mrf.mxu0
        %v556 = vadd.f32 %v411, %v555
        %v557 = vpop.f32.mrf.mxu0
        %558 = vmatprep.mubr.bf16.mxu0 0
        %559 = vmatmul.mubr.bf16.gmra.mxu0 %v488
        %v560 = vpop.f32.mrf.mxu0
        %v561 = vadd.f32 %v411, %v560
        %v562 = vpop.f32.mrf.mxu0
        %v563 = vpop.f32.mrf.mxu0
        %v564 = vadd.f32 %v411, %v563
        %v565 = vpop.f32.mrf.mxu0
        %566 = vmatprep.mubr.bf16.mxu0 0
        %567 = vmatmul.mubr.bf16.gmra.mxu0 %v491
        %v568 = vpop.f32.mrf.mxu0
        %v569 = vadd.f32 %v411, %v568
        %v570 = vpop.f32.mrf.mxu0
        %v571 = vpop.f32.mrf.mxu0
        %v572 = vadd.f32 %v411, %v571
        %v573 = vpop.f32.mrf.mxu0
        %574 = vmatprep.mubr.bf16.mxu0 0
        %575 = vmatmul.mubr.bf16.gmra.mxu0 %v494
        %v576 = vpop.f32.mrf.mxu0
        %v577 = vadd.f32 %v411, %v576
        %v578 = vpop.f32.mrf.mxu0
        %v579 = vpop.f32.mrf.mxu0
        %v580 = vadd.f32 %v411, %v579
        %v581 = vpop.f32.mrf.mxu0
        %582 = vmatprep.mubr.bf16.mxu0 0
        %583 = vmatmul.mubr.bf16.gmra.mxu0 %v497
        %v584 = vpop.f32.mrf.mxu0
        %v585 = vadd.f32 %v411, %v584
        %v586 = vpop.f32.mrf.mxu0
        %v587 = vpop.f32.mrf.mxu0
        %v588 = vadd.f32 %v411, %v587
        %v589 = vpop.f32.mrf.mxu0
        %590 = vmatprep.mubr.bf16.mxu0 0
        %591 = vmatmul.mubr.bf16.gmra.mxu0 %v500
        %v592 = vpop.f32.mrf.mxu0
        %v593 = vadd.f32 %v411, %v592
        %v594 = vpop.f32.mrf.mxu0
        %v595 = vpop.f32.mrf.mxu0
        %v596 = vadd.f32 %v411, %v595
        %v597 = vpop.f32.mrf.mxu0
        %598 = vdwg.mxu0
        %v599 = vmax.f32 %v537, 0.0
        %v600 = vmax.f32 %v540, 0.0
        %v601 = vmax.f32 %v545, 0.0
        %v602 = vmax.f32 %v548, 0.0
        %v603 = vmax.f32 %v553, 0.0
        %v604 = vmax.f32 %v556, 0.0
        %v605 = vmax.f32 %v561, 0.0
        %v606 = vmax.f32 %v564, 0.0
        %v607 = vmax.f32 %v569, 0.0
        %v608 = vmax.f32 %v572, 0.0
        %v609 = vmax.f32 %v577, 0.0
        %v610 = vmax.f32 %v580, 0.0
        %v611 = vmax.f32 %v585, 0.0
        %v612 = vmax.f32 %v588, 0.0
        %v613 = vmax.f32 %v593, 0.0
        %v614 = vmax.f32 %v596, 0.0
        %v615 = vpack.c.bf16 %v600, %v599
        %v616 = vpack.c.bf16 %v602, %v601
        %v617 = vpack.c.bf16 %v604, %v603
        %v618 = vpack.c.bf16 %v606, %v605
        %v619 = vpack.c.bf16 %v608, %v607
        %v620 = vpack.c.bf16 %v610, %v609
        %v621 = vpack.c.bf16 %v612, %v611
        %v622 = vpack.c.bf16 %v614, %v613
        %v623 = vld [vmem:[%s373] sm:$0xf]
        %v624 = vld [vmem:[%s373 + $0x4] sm:$0xf]
        %v625 = vld [vmem:[%s373 + $0x8] sm:$0xf]
        %v626 = vld [vmem:[%s373 + $0xc] sm:$0xf]
        %v627 = vld [vmem:[%s373 + $0x10] sm:$0xf]
        %v628 = vld [vmem:[%s373 + $0x14] sm:$0xf]
        %v629 = vld [vmem:[%s373 + $0x18] sm:$0xf]
        %v630 = vld [vmem:[%s373 + $0x1c] sm:$0xf]
        %v631 = vld [vmem:[%s373 + $0x20] sm:$0xf]
        %v632 = vld [vmem:[%s373 + $0x24] sm:$0xf]
        %v633 = vld [vmem:[%s373 + $0x28] sm:$0xf]
        %v634 = vld [vmem:[%s373 + $0x2c] sm:$0xf]
        %v635 = vld [vmem:[%s373 + $0x30] sm:$0xf]
        %v636 = vld [vmem:[%s373 + $0x34] sm:$0xf]
        %v637 = vld [vmem:[%s373 + $0x38] sm:$0xf]
        %v638 = vld [vmem:[%s373 + $0x3c] sm:$0xf]
        %v639 = vld [vmem:[%s360 + $0x4] sm:$0xf]
        %v640 = vld [vmem:[%s360 + $0xc] sm:$0xf]
        %v641 = vld [vmem:[%s360 + $0x14] sm:$0xf]
        %v642 = vld [vmem:[%s360 + $0x1c] sm:$0xf]
        %v643 = vld [vmem:[%s360 + $0x24] sm:$0xf]
        %v644 = vld [vmem:[%s360 + $0x2c] sm:$0xf]
        %v645 = vld [vmem:[%s360 + $0x34] sm:$0xf]
        %v646 = vld [vmem:[%s360 + $0x3c] sm:$0xf]
        %v647 = vld [vmem:[%s366 + $0x1] sm:$0x1]
        %v649 = vlaneseq
        %v650 = vshrl.u32 %v649, 7
        %v651 = vsub.s32 0, %v650
        %v652 = vrot.slane %v647, %v651
        %v662 = vunpack.c.l.b16 %v639
        %v663 = vunpack.c.l.b16 %v640
        %v664 = vunpack.c.l.b16 %v641
        %v665 = vunpack.c.l.b16 %v642
        %v666 = vunpack.c.l.b16 %v643
        %v667 = vunpack.c.l.b16 %v644
        %v668 = vunpack.c.l.b16 %v645
        %v669 = vunpack.c.l.b16 %v646
        %v670 = vpack.c.b16 %v663, %v662
        %v671 = vpack.c.b16 %v665, %v664
        %v672 = vpack.c.b16 %v667, %v666
        %v673 = vpack.c.b16 %v669, %v668
        %678 = vmatprep.subr.bf16.mxu0 0
        %679 = vmatpush1.bf16.msra.mxu0 0
        %680 = vmatprep.subr.bf16.mxu0 0
        %681 = vmatpush1.bf16.msra.mxu0 0
        %682 = vmatprep.subr.bf16.mxu0 0
        %683 = vmatpush1.bf16.msra.mxu0 0
        %684 = vmatprep.subr.bf16.mxu0 0
        %685 = vmatpush1.bf16.msra.mxu0 0
        %686 = vmatprep.subr.bf16.mxu0 0
        %687 = vmatpush1.bf16.msra.mxu0 %v673
        %688 = vmatprep.subr.bf16.mxu0 0
        %689 = vmatpush1.bf16.msra.mxu0 %v672
        %690 = vmatprep.subr.bf16.mxu0 0
        %691 = vmatpush1.bf16.msra.mxu0 %v671
        %692 = vmatprep.subr.bf16.mxu0 0
        %693 = vmatpush1.bf16.msra.mxu0 %v670
        %694 = vmatprep.subr.bf16.mxu0 0
        %695 = vmatpush2.bf16.msra.mxu0 0
        %696 = vmatprep.subr.bf16.mxu0 0
        %697 = vmatpush2.bf16.msra.mxu0 0
        %698 = vmatprep.subr.bf16.mxu0 0
        %699 = vmatpush2.bf16.msra.mxu0 0
        %700 = vmatprep.subr.bf16.mxu0 0
        %701 = vmatpush2.bf16.msra.mxu0 0
        %702 = vmatprep.subr.bf16.mxu0 0
        %703 = vmatpush2.bf16.msra.mxu0 0
        %704 = vmatprep.subr.bf16.mxu0 0
        %705 = vmatpush2.bf16.msra.mxu0 0
        %706 = vmatprep.subr.bf16.mxu0 0
        %707 = vmatpush2.bf16.msra.mxu0 0
        %708 = vmatprep.subr.bf16.mxu0 0
        %709 = vmatpush2.bf16.msra.mxu0 0
        %710 = vmatprep.mubr.bf16.mxu0 0
        %711 = vmatmul.mubr.bf16.gmra.mxu0 %v479
        %v712 = vpop.f32.mrf.mxu0
        %v713 = vadd.f32 %v652, %v712
        %v714 = vpop.f32.mrf.mxu0
        %v715 = vpop.f32.mrf.mxu0
        %v716 = vadd.f32 %v652, %v715
        %v717 = vpop.f32.mrf.mxu0
        %718 = vmatprep.mubr.bf16.mxu0 0
        %719 = vmatmul.mubr.bf16.gmra.mxu0 %v482
        %v720 = vpop.f32.mrf.mxu0
        %v721 = vadd.f32 %v652, %v720
        %v722 = vpop.f32.mrf.mxu0
        %v723 = vpop.f32.mrf.mxu0
        %v724 = vadd.f32 %v652, %v723
        %v725 = vpop.f32.mrf.mxu0
        %726 = vmatprep.mubr.bf16.mxu0 0
        %727 = vmatmul.mubr.bf16.gmra.mxu0 %v485
        %v728 = vpop.f32.mrf.mxu0
        %v729 = vadd.f32 %v652, %v728
        %v730 = vpop.f32.mrf.mxu0
        %v731 = vpop.f32.mrf.mxu0
        %v732 = vadd.f32 %v652, %v731
        %v733 = vpop.f32.mrf.mxu0
        %734 = vmatprep.mubr.bf16.mxu0 0
        %735 = vmatmul.mubr.bf16.gmra.mxu0 %v488
        %v736 = vpop.f32.mrf.mxu0
        %v737 = vadd.f32 %v652, %v736
        %v738 = vpop.f32.mrf.mxu0
        %v739 = vpop.f32.mrf.mxu0
        %v740 = vadd.f32 %v652, %v739
        %v741 = vpop.f32.mrf.mxu0
        %742 = vmatprep.mubr.bf16.mxu0 0
        %743 = vmatmul.mubr.bf16.gmra.mxu0 %v491
        %v744 = vpop.f32.mrf.mxu0
        %v745 = vadd.f32 %v652, %v744
        %v746 = vpop.f32.mrf.mxu0
        %v747 = vpop.f32.mrf.mxu0
        %v748 = vadd.f32 %v652, %v747
        %v749 = vpop.f32.mrf.mxu0
        %750 = vmatprep.mubr.bf16.mxu0 0
        %751 = vmatmul.mubr.bf16.gmra.mxu0 %v494
        %v752 = vpop.f32.mrf.mxu0
        %v753 = vadd.f32 %v652, %v752
        %v754 = vpop.f32.mrf.mxu0
        %v755 = vpop.f32.mrf.mxu0
        %v756 = vadd.f32 %v652, %v755
        %v757 = vpop.f32.mrf.mxu0
        %758 = vmatprep.mubr.bf16.mxu0 0
        %759 = vmatmul.mubr.bf16.gmra.mxu0 %v497
        %v760 = vpop.f32.mrf.mxu0
        %v761 = vadd.f32 %v652, %v760
        %v762 = vpop.f32.mrf.mxu0
        %v763 = vpop.f32.mrf.mxu0
        %v764 = vadd.f32 %v652, %v763
        %v765 = vpop.f32.mrf.mxu0
        %766 = vmatprep.mubr.bf16.mxu0 0
        %767 = vmatmul.mubr.bf16.gmra.mxu0 %v500
        %v768 = vpop.f32.mrf.mxu0
        %v769 = vadd.f32 %v652, %v768
        %v770 = vpop.f32.mrf.mxu0
        %v771 = vpop.f32.mrf.mxu0
        %v772 = vadd.f32 %v652, %v771
        %v773 = vpop.f32.mrf.mxu0
        %774 = vdwg.mxu0
        %v775 = vmax.f32 %v713, 0.0
        %v776 = vmax.f32 %v716, 0.0
        %v777 = vmax.f32 %v721, 0.0
        %v778 = vmax.f32 %v724, 0.0
        %v779 = vmax.f32 %v729, 0.0
        %v780 = vmax.f32 %v732, 0.0
        %v781 = vmax.f32 %v737, 0.0
        %v782 = vmax.f32 %v740, 0.0
        %v783 = vmax.f32 %v745, 0.0
        %v784 = vmax.f32 %v748, 0.0
        %v785 = vmax.f32 %v753, 0.0
        %v786 = vmax.f32 %v756, 0.0
        %v787 = vmax.f32 %v761, 0.0
        %v788 = vmax.f32 %v764, 0.0
        %v789 = vmax.f32 %v769, 0.0
        %v790 = vmax.f32 %v772, 0.0
        %v791 = vpack.c.bf16 %v776, %v775
        %v792 = vpack.c.bf16 %v778, %v777
        %v793 = vpack.c.bf16 %v780, %v779
        %v794 = vpack.c.bf16 %v782, %v781
        %v795 = vpack.c.bf16 %v784, %v783
        %v796 = vpack.c.bf16 %v786, %v785
        %v797 = vpack.c.bf16 %v788, %v787
        %v798 = vpack.c.bf16 %v790, %v789
        %v799 = vld [vmem:[%s373 + $0x40] sm:$0xf]
        %v800 = vld [vmem:[%s373 + $0x44] sm:$0xf]
        %v801 = vld [vmem:[%s373 + $0x48] sm:$0xf]
        %v802 = vld [vmem:[%s373 + $0x4c] sm:$0xf]
        %v803 = vld [vmem:[%s373 + $0x50] sm:$0xf]
        %v804 = vld [vmem:[%s373 + $0x54] sm:$0xf]
        %v805 = vld [vmem:[%s373 + $0x58] sm:$0xf]
        %v806 = vld [vmem:[%s373 + $0x5c] sm:$0xf]
        %v807 = vld [vmem:[%s373 + $0x60] sm:$0xf]
        %v808 = vld [vmem:[%s373 + $0x64] sm:$0xf]
        %v809 = vld [vmem:[%s373 + $0x68] sm:$0xf]
        %v810 = vld [vmem:[%s373 + $0x6c] sm:$0xf]
        %v811 = vld [vmem:[%s373 + $0x70] sm:$0xf]
        %v812 = vld [vmem:[%s373 + $0x74] sm:$0xf]
        %v813 = vld [vmem:[%s373 + $0x78] sm:$0xf]
        %v814 = vld [vmem:[%s373 + $0x7c] sm:$0xf]
        %v831 = vunpack.c.l.b16 %v799
        %v832 = vunpack.c.l.b16 %v800
        %v833 = vunpack.c.l.b16 %v801
        %v834 = vunpack.c.l.b16 %v802
        %v835 = vunpack.c.l.b16 %v803
        %v836 = vunpack.c.l.b16 %v804
        %v837 = vunpack.c.l.b16 %v805
        %v838 = vunpack.c.l.b16 %v806
        %v839 = vunpack.c.l.b16 %v807
        %v840 = vunpack.c.l.b16 %v808
        %v841 = vunpack.c.l.b16 %v809
        %v842 = vunpack.c.l.b16 %v810
        %v843 = vunpack.c.l.b16 %v811
        %v844 = vunpack.c.l.b16 %v812
        %v845 = vunpack.c.l.b16 %v813
        %v846 = vunpack.c.l.b16 %v814
        %v847 = vpack.c.b16 %v832, %v831
        %v848 = vpack.c.b16 %v834, %v833
        %v849 = vpack.c.b16 %v836, %v835
        %v850 = vpack.c.b16 %v838, %v837
        %v851 = vpack.c.b16 %v840, %v839
        %v852 = vpack.c.b16 %v842, %v841
        %v853 = vpack.c.b16 %v844, %v843
        %v854 = vpack.c.b16 %v846, %v845
        %863 = vmatprep.subr.bf16.mxu0 0
        %864 = vmatpush1.bf16.msra.mxu0 %v854
        %865 = vmatprep.subr.bf16.mxu0 0
        %866 = vmatpush1.bf16.msra.mxu0 %v853
        %867 = vmatprep.subr.bf16.mxu0 0
        %868 = vmatpush1.bf16.msra.mxu0 %v852
        %869 = vmatprep.subr.bf16.mxu0 0
        %870 = vmatpush1.bf16.msra.mxu0 %v851
        %871 = vmatprep.subr.bf16.mxu0 0
        %872 = vmatpush1.bf16.msra.mxu0 %v850
        %873 = vmatprep.subr.bf16.mxu0 0
        %874 = vmatpush1.bf16.msra.mxu0 %v849
        %875 = vmatprep.subr.bf16.mxu0 0
        %876 = vmatpush1.bf16.msra.mxu0 %v848
        %877 = vmatprep.subr.bf16.mxu0 0
        %878 = vmatpush1.bf16.msra.mxu0 %v847
        %879 = vmatprep.subr.bf16.mxu0 0
        %880 = vmatpush2.bf16.msra.mxu0 0
        %881 = vmatprep.subr.bf16.mxu0 0
        %882 = vmatpush2.bf16.msra.mxu0 0
        %883 = vmatprep.subr.bf16.mxu0 0
        %884 = vmatpush2.bf16.msra.mxu0 0
        %885 = vmatprep.subr.bf16.mxu0 0
        %886 = vmatpush2.bf16.msra.mxu0 0
        %887 = vmatprep.subr.bf16.mxu0 0
        %888 = vmatpush2.bf16.msra.mxu0 0
        %889 = vmatprep.subr.bf16.mxu0 0
        %890 = vmatpush2.bf16.msra.mxu0 0
        %891 = vmatprep.subr.bf16.mxu0 0
        %892 = vmatpush2.bf16.msra.mxu0 0
        %893 = vmatprep.subr.bf16.mxu0 0
        %894 = vmatpush2.bf16.msra.mxu0 0
        %895 = vmatprep.mubr.bf16.mxu0 0
        %896 = vmatmul.mubr.bf16.gmra.mxu0 %v791
        %v897 = vpop.f32.mrf.mxu0
        %v898 = vadd.f32 0.0, %v897
        %v899 = vpop.f32.mrf.mxu0
        %v900 = vpop.f32.mrf.mxu0
        %v901 = vadd.f32 0.0, %v900
        %v902 = vpop.f32.mrf.mxu0
        %903 = vmatprep.mubr.bf16.mxu0 0
        %904 = vmatmul.mubr.bf16.gmra.mxu0 %v792
        %v905 = vpop.f32.mrf.mxu0
        %v906 = vadd.f32 0.0, %v905
        %v907 = vpop.f32.mrf.mxu0
        %v908 = vpop.f32.mrf.mxu0
        %v909 = vadd.f32 0.0, %v908
        %v910 = vpop.f32.mrf.mxu0
        %911 = vmatprep.mubr.bf16.mxu0 0
        %912 = vmatmul.mubr.bf16.gmra.mxu0 %v793
        %v913 = vpop.f32.mrf.mxu0
        %v914 = vadd.f32 0.0, %v913
        %v915 = vpop.f32.mrf.mxu0
        %v916 = vpop.f32.mrf.mxu0
        %v917 = vadd.f32 0.0, %v916
        %v918 = vpop.f32.mrf.mxu0
        %919 = vmatprep.mubr.bf16.mxu0 0
        %920 = vmatmul.mubr.bf16.gmra.mxu0 %v794
        %v921 = vpop.f32.mrf.mxu0
        %v922 = vadd.f32 0.0, %v921
        %v923 = vpop.f32.mrf.mxu0
        %v924 = vpop.f32.mrf.mxu0
        %v925 = vadd.f32 0.0, %v924
        %v926 = vpop.f32.mrf.mxu0
        %927 = vmatprep.mubr.bf16.mxu0 0
        %928 = vmatmul.mubr.bf16.gmra.mxu0 %v795
        %v929 = vpop.f32.mrf.mxu0
        %v930 = vadd.f32 0.0, %v929
        %v931 = vpop.f32.mrf.mxu0
        %v932 = vpop.f32.mrf.mxu0
        %v933 = vadd.f32 0.0, %v932
        %v934 = vpop.f32.mrf.mxu0
        %935 = vmatprep.mubr.bf16.mxu0 0
        %936 = vmatmul.mubr.bf16.gmra.mxu0 %v796
        %v937 = vpop.f32.mrf.mxu0
        %v938 = vadd.f32 0.0, %v937
        %v939 = vpop.f32.mrf.mxu0
        %v940 = vpop.f32.mrf.mxu0
        %v941 = vadd.f32 0.0, %v940
        %v942 = vpop.f32.mrf.mxu0
        %943 = vmatprep.mubr.bf16.mxu0 0
        %944 = vmatmul.mubr.bf16.gmra.mxu0 %v797
        %v945 = vpop.f32.mrf.mxu0
        %v946 = vadd.f32 0.0, %v945
        %v947 = vpop.f32.mrf.mxu0
        %v948 = vpop.f32.mrf.mxu0
        %v949 = vadd.f32 0.0, %v948
        %v950 = vpop.f32.mrf.mxu0
        %951 = vmatprep.mubr.bf16.mxu0 0
        %952 = vmatmul.mubr.bf16.gmra.mxu0 %v798
        %v953 = vpop.f32.mrf.mxu0
        %v954 = vadd.f32 0.0, %v953
        %v955 = vpop.f32.mrf.mxu0
        %v956 = vpop.f32.mrf.mxu0
        %v957 = vadd.f32 0.0, %v956
        %v958 = vpop.f32.mrf.mxu0
        %959 = vdwg.mxu0
        %v976 = vunpack.c.l.b16 %v623
        %v977 = vunpack.c.l.b16 %v624
        %v978 = vunpack.c.l.b16 %v625
        %v979 = vunpack.c.l.b16 %v626
        %v980 = vunpack.c.l.b16 %v627
        %v981 = vunpack.c.l.b16 %v628
        %v982 = vunpack.c.l.b16 %v629
        %v983 = vunpack.c.l.b16 %v630
        %v984 = vunpack.c.l.b16 %v631
        %v985 = vunpack.c.l.b16 %v632
        %v986 = vunpack.c.l.b16 %v633
        %v987 = vunpack.c.l.b16 %v634
        %v988 = vunpack.c.l.b16 %v635
        %v989 = vunpack.c.l.b16 %v636
        %v990 = vunpack.c.l.b16 %v637
        %v991 = vunpack.c.l.b16 %v638
        %v992 = vpack.c.b16 %v977, %v976
        %v993 = vpack.c.b16 %v979, %v978
        %v994 = vpack.c.b16 %v981, %v980
        %v995 = vpack.c.b16 %v983, %v982
        %v996 = vpack.c.b16 %v985, %v984
        %v997 = vpack.c.b16 %v987, %v986
        %v998 = vpack.c.b16 %v989, %v988
        %v999 = vpack.c.b16 %v991, %v990
        %1008 = vmatprep.subr.bf16.mxu0 0
        %1009 = vmatpush1.bf16.msra.mxu0 %v999
        %1010 = vmatprep.subr.bf16.mxu0 0
        %1011 = vmatpush1.bf16.msra.mxu0 %v998
        %1012 = vmatprep.subr.bf16.mxu0 0
        %1013 = vmatpush1.bf16.msra.mxu0 %v997
        %1014 = vmatprep.subr.bf16.mxu0 0
        %1015 = vmatpush1.bf16.msra.mxu0 %v996
        %1016 = vmatprep.subr.bf16.mxu0 0
        %1017 = vmatpush1.bf16.msra.mxu0 %v995
        %1018 = vmatprep.subr.bf16.mxu0 0
        %1019 = vmatpush1.bf16.msra.mxu0 %v994
        %1020 = vmatprep.subr.bf16.mxu0 0
        %1021 = vmatpush1.bf16.msra.mxu0 %v993
        %1022 = vmatprep.subr.bf16.mxu0 0
        %1023 = vmatpush1.bf16.msra.mxu0 %v992
        %1024 = vmatprep.subr.bf16.mxu0 0
        %1025 = vmatpush2.bf16.msra.mxu0 0
        %1026 = vmatprep.subr.bf16.mxu0 0
        %1027 = vmatpush2.bf16.msra.mxu0 0
        %1028 = vmatprep.subr.bf16.mxu0 0
        %1029 = vmatpush2.bf16.msra.mxu0 0
        %1030 = vmatprep.subr.bf16.mxu0 0
        %1031 = vmatpush2.bf16.msra.mxu0 0
        %1032 = vmatprep.subr.bf16.mxu0 0
        %1033 = vmatpush2.bf16.msra.mxu0 0
        %1034 = vmatprep.subr.bf16.mxu0 0
        %1035 = vmatpush2.bf16.msra.mxu0 0
        %1036 = vmatprep.subr.bf16.mxu0 0
        %1037 = vmatpush2.bf16.msra.mxu0 0
        %1038 = vmatprep.subr.bf16.mxu0 0
        %1039 = vmatpush2.bf16.msra.mxu0 0
        %1040 = vmatprep.mubr.bf16.mxu0 0
        %1041 = vmatmul.mubr.bf16.gmra.mxu0 %v615
        %v1042 = vpop.f32.mrf.mxu0
        %v1043 = vadd.f32 %v898, %v1042
        %v1044 = vpop.f32.mrf.mxu0
        %v1045 = vpop.f32.mrf.mxu0
        %v1046 = vadd.f32 %v901, %v1045
        %v1047 = vpop.f32.mrf.mxu0
        %1048 = vmatprep.mubr.bf16.mxu0 0
        %1049 = vmatmul.mubr.bf16.gmra.mxu0 %v616
        %v1050 = vpop.f32.mrf.mxu0
        %v1051 = vadd.f32 %v906, %v1050
        %v1052 = vpop.f32.mrf.mxu0
        %v1053 = vpop.f32.mrf.mxu0
        %v1054 = vadd.f32 %v909, %v1053
        %v1055 = vpop.f32.mrf.mxu0
        %1056 = vmatprep.mubr.bf16.mxu0 0
        %1057 = vmatmul.mubr.bf16.gmra.mxu0 %v617
        %v1058 = vpop.f32.mrf.mxu0
        %v1059 = vadd.f32 %v914, %v1058
        %v1060 = vpop.f32.mrf.mxu0
        %v1061 = vpop.f32.mrf.mxu0
        %v1062 = vadd.f32 %v917, %v1061
        %v1063 = vpop.f32.mrf.mxu0
        %1064 = vmatprep.mubr.bf16.mxu0 0
        %1065 = vmatmul.mubr.bf16.gmra.mxu0 %v618
        %v1066 = vpop.f32.mrf.mxu0
        %v1067 = vadd.f32 %v922, %v1066
        %v1068 = vpop.f32.mrf.mxu0
        %v1069 = vpop.f32.mrf.mxu0
        %v1070 = vadd.f32 %v925, %v1069
        %v1071 = vpop.f32.mrf.mxu0
        %1072 = vmatprep.mubr.bf16.mxu0 0
        %1073 = vmatmul.mubr.bf16.gmra.mxu0 %v619
        %v1074 = vpop.f32.mrf.mxu0
        %v1075 = vadd.f32 %v930, %v1074
        %v1076 = vpop.f32.mrf.mxu0
        %v1077 = vpop.f32.mrf.mxu0
        %v1078 = vadd.f32 %v933, %v1077
        %v1079 = vpop.f32.mrf.mxu0
        %1080 = vmatprep.mubr.bf16.mxu0 0
        %1081 = vmatmul.mubr.bf16.gmra.mxu0 %v620
        %v1082 = vpop.f32.mrf.mxu0
        %v1083 = vadd.f32 %v938, %v1082
        %v1084 = vpop.f32.mrf.mxu0
        %v1085 = vpop.f32.mrf.mxu0
        %v1086 = vadd.f32 %v941, %v1085
        %v1087 = vpop.f32.mrf.mxu0
        %1088 = vmatprep.mubr.bf16.mxu0 0
        %1089 = vmatmul.mubr.bf16.gmra.mxu0 %v621
        %v1090 = vpop.f32.mrf.mxu0
        %v1091 = vadd.f32 %v946, %v1090
        %v1092 = vpop.f32.mrf.mxu0
        %v1093 = vpop.f32.mrf.mxu0
        %v1094 = vadd.f32 %v949, %v1093
        %v1095 = vpop.f32.mrf.mxu0
        %1096 = vmatprep.mubr.bf16.mxu0 0
        %1097 = vmatmul.mubr.bf16.gmra.mxu0 %v622
        %v1098 = vpop.f32.mrf.mxu0
        %v1099 = vadd.f32 %v954, %v1098
        %v1100 = vpop.f32.mrf.mxu0
        %v1101 = vpop.f32.mrf.mxu0
        %v1102 = vadd.f32 %v957, %v1101
        %v1103 = vpop.f32.mrf.mxu0
        %1104 = vdwg.mxu0
        %v1105 = vld [vmem:[%s378] sm:$0x1]
        %v1107 = vlaneseq
        %v1108 = vshrl.u32 %v1107, 7
        %v1109 = vsub.s32 0, %v1108
        %v1110 = vrot.slane %v1105, %v1109
        %v1112 = vadd.f32 %v1043, %v1110
        %v1113 = vadd.f32 %v1046, %v1110
        %v1114 = vadd.f32 %v1051, %v1110
        %v1115 = vadd.f32 %v1054, %v1110
        %v1116 = vadd.f32 %v1059, %v1110
        %v1117 = vadd.f32 %v1062, %v1110
        %v1118 = vadd.f32 %v1067, %v1110
        %v1119 = vadd.f32 %v1070, %v1110
        %v1120 = vadd.f32 %v1075, %v1110
        %v1121 = vadd.f32 %v1078, %v1110
        %v1122 = vadd.f32 %v1083, %v1110
        %v1123 = vadd.f32 %v1086, %v1110
        %v1124 = vadd.f32 %v1091, %v1110
        %v1125 = vadd.f32 %v1094, %v1110
        %v1126 = vadd.f32 %v1099, %v1110
        %v1127 = vadd.f32 %v1102, %v1110
        %v1128 = vld [vmem:[%s353] sm:$0xff]
        %v1129 = vld [vmem:[%s353 + $0x8] sm:$0xff]
        %v1130 = vld [vmem:[%s353 + $0x10] sm:$0xff]
        %v1131 = vld [vmem:[%s353 + $0x18] sm:$0xff]
        %v1132 = vld [vmem:[%s353 + $0x20] sm:$0xff]
        %v1133 = vld [vmem:[%s353 + $0x28] sm:$0xff]
        %v1134 = vld [vmem:[%s353 + $0x30] sm:$0xff]
        %v1135 = vld [vmem:[%s353 + $0x38] sm:$0xff]
        %v1136 = vld [vmem:[%s353 + $0x40] sm:$0xff]
        %v1137 = vld [vmem:[%s353 + $0x48] sm:$0xff]
        %v1138 = vld [vmem:[%s353 + $0x50] sm:$0xff]
        %v1139 = vld [vmem:[%s353 + $0x58] sm:$0xff]
        %v1140 = vld [vmem:[%s353 + $0x60] sm:$0xff]
        %v1141 = vld [vmem:[%s353 + $0x68] sm:$0xff]
        %v1142 = vld [vmem:[%s353 + $0x70] sm:$0xff]
        %v1143 = vld [vmem:[%s353 + $0x78] sm:$0xff]
        %v1144 = vlaneseq
        %v1145 = vand.u32 %v1144, 127
        %vm1146 = vcmp.eq.s32.totalorder %v1145, 0
        %v1147 = vsel %vm1146, 1.0, 0.0
        %vm1148 = vcmp.eq.s32.totalorder %v1128, 1
        %vm1149 = vcmp.eq.s32.totalorder %v1129, 1
        %vm1150 = vcmp.eq.s32.totalorder %v1130, 1
        %vm1151 = vcmp.eq.s32.totalorder %v1131, 1
        %vm1152 = vcmp.eq.s32.totalorder %v1132, 1
        %vm1153 = vcmp.eq.s32.totalorder %v1133, 1
        %vm1154 = vcmp.eq.s32.totalorder %v1134, 1
        %vm1155 = vcmp.eq.s32.totalorder %v1135, 1
        %vm1156 = vcmp.eq.s32.totalorder %v1136, 1
        %vm1157 = vcmp.eq.s32.totalorder %v1137, 1
        %vm1158 = vcmp.eq.s32.totalorder %v1138, 1
        %vm1159 = vcmp.eq.s32.totalorder %v1139, 1
        %vm1160 = vcmp.eq.s32.totalorder %v1140, 1
        %vm1161 = vcmp.eq.s32.totalorder %v1141, 1
        %vm1162 = vcmp.eq.s32.totalorder %v1142, 1
        %vm1163 = vcmp.eq.s32.totalorder %v1143, 1
        %v1164 = vsel %vm1148, 1, 0
        %v1165 = vsel %vm1149, 1, 0
        %v1166 = vsel %vm1150, 1, 0
        %v1167 = vsel %vm1151, 1, 0
        %v1168 = vsel %vm1152, 1, 0
        %v1169 = vsel %vm1153, 1, 0
        %v1170 = vsel %vm1154, 1, 0
        %v1171 = vsel %vm1155, 1, 0
        %v1172 = vsel %vm1156, 1, 0
        %v1173 = vsel %vm1157, 1, 0
        %v1174 = vsel %vm1158, 1, 0
        %v1175 = vsel %vm1159, 1, 0
        %v1176 = vsel %vm1160, 1, 0
        %v1177 = vsel %vm1161, 1, 0
        %v1178 = vsel %vm1162, 1, 0
        %v1179 = vsel %vm1163, 1, 0
        %1180 = vset.pattern.permute.xlu0 0
        %1181 = vperm.xlu0 %1180, %v1164
        %v1182 = vpop.permute.xlu0 %1181
        %1183 = vset.pattern.permute.xlu0 0
        %1184 = vperm.xlu0 %1183, %v1165
        %v1185 = vpop.permute.xlu0 %1184
        %1186 = vset.pattern.permute.xlu0 0
        %1187 = vperm.xlu0 %1186, %v1166
        %v1188 = vpop.permute.xlu0 %1187
        %1189 = vset.pattern.permute.xlu0 0
        %1190 = vperm.xlu0 %1189, %v1167
        %v1191 = vpop.permute.xlu0 %1190
        %1192 = vset.pattern.permute.xlu0 0
        %1193 = vperm.xlu0 %1192, %v1168
        %v1194 = vpop.permute.xlu0 %1193
        %1195 = vset.pattern.permute.xlu0 0
        %1196 = vperm.xlu0 %1195, %v1169
        %v1197 = vpop.permute.xlu0 %1196
        %1198 = vset.pattern.permute.xlu0 0
        %1199 = vperm.xlu0 %1198, %v1170
        %v1200 = vpop.permute.xlu0 %1199
        %1201 = vset.pattern.permute.xlu0 0
        %1202 = vperm.xlu0 %1201, %v1171
        %v1203 = vpop.permute.xlu0 %1202
        %1204 = vset.pattern.permute.xlu0 0
        %1205 = vperm.xlu0 %1204, %v1172
        %v1206 = vpop.permute.xlu0 %1205
        %1207 = vset.pattern.permute.xlu0 0
        %1208 = vperm.xlu0 %1207, %v1173
        %v1209 = vpop.permute.xlu0 %1208
        %1210 = vset.pattern.permute.xlu0 0
        %1211 = vperm.xlu0 %1210, %v1174
        %v1212 = vpop.permute.xlu0 %1211
        %1213 = vset.pattern.permute.xlu0 0
        %1214 = vperm.xlu0 %1213, %v1175
        %v1215 = vpop.permute.xlu0 %1214
        %1216 = vset.pattern.permute.xlu0 0
        %1217 = vperm.xlu0 %1216, %v1176
        %v1218 = vpop.permute.xlu0 %1217
        %1219 = vset.pattern.permute.xlu0 0
        %1220 = vperm.xlu0 %1219, %v1177
        %v1221 = vpop.permute.xlu0 %1220
        %1222 = vset.pattern.permute.xlu0 0
        %1223 = vperm.xlu0 %1222, %v1178
        %v1224 = vpop.permute.xlu0 %1223
        %1225 = vset.pattern.permute.xlu0 0
        %1226 = vperm.xlu0 %1225, %v1179
        %v1227 = vpop.permute.xlu0 %1226
        %vm1228 = vcmp.eq.s32.totalorder %v1182, 1
        %vm1229 = vcmp.eq.s32.totalorder %v1185, 1
        %vm1230 = vcmp.eq.s32.totalorder %v1188, 1
        %vm1231 = vcmp.eq.s32.totalorder %v1191, 1
        %vm1232 = vcmp.eq.s32.totalorder %v1194, 1
        %vm1233 = vcmp.eq.s32.totalorder %v1197, 1
        %vm1234 = vcmp.eq.s32.totalorder %v1200, 1
        %vm1235 = vcmp.eq.s32.totalorder %v1203, 1
        %vm1236 = vcmp.eq.s32.totalorder %v1206, 1
        %vm1237 = vcmp.eq.s32.totalorder %v1209, 1
        %vm1238 = vcmp.eq.s32.totalorder %v1212, 1
        %vm1239 = vcmp.eq.s32.totalorder %v1215, 1
        %vm1240 = vcmp.eq.s32.totalorder %v1218, 1
        %vm1241 = vcmp.eq.s32.totalorder %v1221, 1
        %vm1242 = vcmp.eq.s32.totalorder %v1224, 1
        %vm1243 = vcmp.eq.s32.totalorder %v1227, 1
        %v1244 = vsel %vm1228, %v1147, %v1112
        %v1245 = vsel %vm1229, %v1147, %v1113
        %v1246 = vsel %vm1230, %v1147, %v1114
        %v1247 = vsel %vm1231, %v1147, %v1115
        %v1248 = vsel %vm1232, %v1147, %v1116
        %v1249 = vsel %vm1233, %v1147, %v1117
        %v1250 = vsel %vm1234, %v1147, %v1118
        %v1251 = vsel %vm1235, %v1147, %v1119
        %v1252 = vsel %vm1236, %v1147, %v1120
        %v1253 = vsel %vm1237, %v1147, %v1121
        %v1254 = vsel %vm1238, %v1147, %v1122
        %v1255 = vsel %vm1239, %v1147, %v1123
        %v1256 = vsel %vm1240, %v1147, %v1124
        %v1257 = vsel %vm1241, %v1147, %v1125
        %v1258 = vsel %vm1242, %v1147, %v1126
        %v1259 = vsel %vm1243, %v1147, %v1127
        %vm1260 = vcmp.eq.s32.totalorder %v1128, 2
        %vm1261 = vcmp.eq.s32.totalorder %v1129, 2
        %vm1262 = vcmp.eq.s32.totalorder %v1130, 2
        %vm1263 = vcmp.eq.s32.totalorder %v1131, 2
        %vm1264 = vcmp.eq.s32.totalorder %v1132, 2
        %vm1265 = vcmp.eq.s32.totalorder %v1133, 2
        %vm1266 = vcmp.eq.s32.totalorder %v1134, 2
        %vm1267 = vcmp.eq.s32.totalorder %v1135, 2
        %vm1268 = vcmp.eq.s32.totalorder %v1136, 2
        %vm1269 = vcmp.eq.s32.totalorder %v1137, 2
        %vm1270 = vcmp.eq.s32.totalorder %v1138, 2
        %vm1271 = vcmp.eq.s32.totalorder %v1139, 2
        %vm1272 = vcmp.eq.s32.totalorder %v1140, 2
        %vm1273 = vcmp.eq.s32.totalorder %v1141, 2
        %vm1274 = vcmp.eq.s32.totalorder %v1142, 2
        %vm1275 = vcmp.eq.s32.totalorder %v1143, 2
        %v1276 = vsel %vm1260, 1, 0
        %v1277 = vsel %vm1261, 1, 0
        %v1278 = vsel %vm1262, 1, 0
        %v1279 = vsel %vm1263, 1, 0
        %v1280 = vsel %vm1264, 1, 0
        %v1281 = vsel %vm1265, 1, 0
        %v1282 = vsel %vm1266, 1, 0
        %v1283 = vsel %vm1267, 1, 0
        %v1284 = vsel %vm1268, 1, 0
        %v1285 = vsel %vm1269, 1, 0
        %v1286 = vsel %vm1270, 1, 0
        %v1287 = vsel %vm1271, 1, 0
        %v1288 = vsel %vm1272, 1, 0
        %v1289 = vsel %vm1273, 1, 0
        %v1290 = vsel %vm1274, 1, 0
        %v1291 = vsel %vm1275, 1, 0
        %1292 = vset.pattern.permute.xlu0 0
        %1293 = vperm.xlu0 %1292, %v1276
        %v1294 = vpop.permute.xlu0 %1293
        %1295 = vset.pattern.permute.xlu0 0
        %1296 = vperm.xlu0 %1295, %v1277
        %v1297 = vpop.permute.xlu0 %1296
        %1298 = vset.pattern.permute.xlu0 0
        %1299 = vperm.xlu0 %1298, %v1278
        %v1300 = vpop.permute.xlu0 %1299
        %1301 = vset.pattern.permute.xlu0 0
        %1302 = vperm.xlu0 %1301, %v1279
        %v1303 = vpop.permute.xlu0 %1302
        %1304 = vset.pattern.permute.xlu0 0
        %1305 = vperm.xlu0 %1304, %v1280
        %v1306 = vpop.permute.xlu0 %1305
        %1307 = vset.pattern.permute.xlu0 0
        %1308 = vperm.xlu0 %1307, %v1281
        %v1309 = vpop.permute.xlu0 %1308
        %1310 = vset.pattern.permute.xlu0 0
        %1311 = vperm.xlu0 %1310, %v1282
        %v1312 = vpop.permute.xlu0 %1311
        %1313 = vset.pattern.permute.xlu0 0
        %1314 = vperm.xlu0 %1313, %v1283
        %v1315 = vpop.permute.xlu0 %1314
        %1316 = vset.pattern.permute.xlu0 0
        %1317 = vperm.xlu0 %1316, %v1284
        %v1318 = vpop.permute.xlu0 %1317
        %1319 = vset.pattern.permute.xlu0 0
        %1320 = vperm.xlu0 %1319, %v1285
        %v1321 = vpop.permute.xlu0 %1320
        %1322 = vset.pattern.permute.xlu0 0
        %1323 = vperm.xlu0 %1322, %v1286
        %v1324 = vpop.permute.xlu0 %1323
        %1325 = vset.pattern.permute.xlu0 0
        %1326 = vperm.xlu0 %1325, %v1287
        %v1327 = vpop.permute.xlu0 %1326
        %1328 = vset.pattern.permute.xlu0 0
        %1329 = vperm.xlu0 %1328, %v1288
        %v1330 = vpop.permute.xlu0 %1329
        %1331 = vset.pattern.permute.xlu0 0
        %1332 = vperm.xlu0 %1331, %v1289
        %v1333 = vpop.permute.xlu0 %1332
        %1334 = vset.pattern.permute.xlu0 0
        %1335 = vperm.xlu0 %1334, %v1290
        %v1336 = vpop.permute.xlu0 %1335
        %1337 = vset.pattern.permute.xlu0 0
        %1338 = vperm.xlu0 %1337, %v1291
        %v1339 = vpop.permute.xlu0 %1338
        %vm1340 = vcmp.eq.s32.totalorder %v1294, 1
        %vm1341 = vcmp.eq.s32.totalorder %v1297, 1
        %vm1342 = vcmp.eq.s32.totalorder %v1300, 1
        %vm1343 = vcmp.eq.s32.totalorder %v1303, 1
        %vm1344 = vcmp.eq.s32.totalorder %v1306, 1
        %vm1345 = vcmp.eq.s32.totalorder %v1309, 1
        %vm1346 = vcmp.eq.s32.totalorder %v1312, 1
        %vm1347 = vcmp.eq.s32.totalorder %v1315, 1
        %vm1348 = vcmp.eq.s32.totalorder %v1318, 1
        %vm1349 = vcmp.eq.s32.totalorder %v1321, 1
        %vm1350 = vcmp.eq.s32.totalorder %v1324, 1
        %vm1351 = vcmp.eq.s32.totalorder %v1327, 1
        %vm1352 = vcmp.eq.s32.totalorder %v1330, 1
        %vm1353 = vcmp.eq.s32.totalorder %v1333, 1
        %vm1354 = vcmp.eq.s32.totalorder %v1336, 1
        %vm1355 = vcmp.eq.s32.totalorder %v1339, 1
        %v1356 = vsel %vm1340, -inf, %v1244
        %v1357 = vsel %vm1341, -inf, %v1245
        %v1358 = vsel %vm1342, -inf, %v1246
        %v1359 = vsel %vm1343, -inf, %v1247
        %v1360 = vsel %vm1344, -inf, %v1248
        %v1361 = vsel %vm1345, -inf, %v1249
        %v1362 = vsel %vm1346, -inf, %v1250
        %v1363 = vsel %vm1347, -inf, %v1251
        %v1364 = vsel %vm1348, -inf, %v1252
        %v1365 = vsel %vm1349, -inf, %v1253
        %v1366 = vsel %vm1350, -inf, %v1254
        %v1367 = vsel %vm1351, -inf, %v1255
        %v1368 = vsel %vm1352, -inf, %v1256
        %v1369 = vsel %vm1353, -inf, %v1257
        %v1370 = vsel %vm1354, -inf, %v1258
        %v1371 = vsel %vm1355, -inf, %v1259
        %v1372 = vpack.c.bf16 %v1357, %v1356
        %v1373 = vpack.c.bf16 %v1359, %v1358
        %v1374 = vpack.c.bf16 %v1361, %v1360
        %v1375 = vpack.c.bf16 %v1363, %v1362
        %v1376 = vpack.c.bf16 %v1365, %v1364
        %v1377 = vpack.c.bf16 %v1367, %v1366
        %v1378 = vpack.c.bf16 %v1369, %v1368
        %v1379 = vpack.c.bf16 %v1371, %v1370
        %v1388 = vunpack.c.l.b16 %v1372
        %v1389 = vunpack.c.h.b16 %v1372
        %v1390 = vunpack.c.l.b16 %v1373
        %v1391 = vunpack.c.h.b16 %v1373
        %v1392 = vunpack.c.l.b16 %v1374
        %v1393 = vunpack.c.h.b16 %v1374
        %v1394 = vunpack.c.l.b16 %v1375
        %v1395 = vunpack.c.h.b16 %v1375
        %v1396 = vunpack.c.l.b16 %v1376
        %v1397 = vunpack.c.h.b16 %v1376
        %v1398 = vunpack.c.l.b16 %v1377
        %v1399 = vunpack.c.h.b16 %v1377
        %v1400 = vunpack.c.l.b16 %v1378
        %v1401 = vunpack.c.h.b16 %v1378
        %v1402 = vunpack.c.l.b16 %v1379
        %v1403 = vunpack.c.h.b16 %v1379
        %v1404 = vpack.c.b16 %v1388, %v1388
        %v1405 = vpack.c.b16 %v1389, %v1389
        %v1406 = vpack.c.b16 %v1390, %v1390
        %v1407 = vpack.c.b16 %v1391, %v1391
        %v1408 = vpack.c.b16 %v1392, %v1392
        %v1409 = vpack.c.b16 %v1393, %v1393
        %v1410 = vpack.c.b16 %v1394, %v1394
        %v1411 = vpack.c.b16 %v1395, %v1395
        %v1412 = vpack.c.b16 %v1396, %v1396
        %v1413 = vpack.c.b16 %v1397, %v1397
        %v1414 = vpack.c.b16 %v1398, %v1398
        %v1415 = vpack.c.b16 %v1399, %v1399
        %v1416 = vpack.c.b16 %v1400, %v1400
        %v1417 = vpack.c.b16 %v1401, %v1401
        %v1418 = vpack.c.b16 %v1402, %v1402
        %v1419 = vpack.c.b16 %v1403, %v1403
        %1436 = vst [vmem:[%s342] sm:$0xf] %v1404
        %1437 = vst [vmem:[%s342 + $0x4] sm:$0xf] %v1405
        %1438 = vst [vmem:[%s342 + $0x8] sm:$0xf] %v1406
        %1439 = vst [vmem:[%s342 + $0xc] sm:$0xf] %v1407
        %1440 = vst [vmem:[%s342 + $0x10] sm:$0xf] %v1408
        %1441 = vst [vmem:[%s342 + $0x14] sm:$0xf] %v1409
        %1442 = vst [vmem:[%s342 + $0x18] sm:$0xf] %v1410
        %1443 = vst [vmem:[%s342 + $0x1c] sm:$0xf] %v1411
        %1444 = vst [vmem:[%s342 + $0x20] sm:$0xf] %v1412
        %1445 = vst [vmem:[%s342 + $0x24] sm:$0xf] %v1413
        %1446 = vst [vmem:[%s342 + $0x28] sm:$0xf] %v1414
        %1447 = vst [vmem:[%s342 + $0x2c] sm:$0xf] %v1415
        %1448 = vst [vmem:[%s342 + $0x30] sm:$0xf] %v1416
        %1449 = vst [vmem:[%s342 + $0x34] sm:$0xf] %v1417
        %1450 = vst [vmem:[%s342 + $0x38] sm:$0xf] %v1418
        %1451 = vst [vmem:[%s342 + $0x3c] sm:$0xf] %v1419
        %s1452 = sand.u32 %s199, 1
        %s1453 = scalar_lea.sflag [#allocation5], %s1452
        %s1454 = sand.u32 %s199, 1
        %s1455 = smul.addr %s1454, 64
        %s1456 = scalar_lea.vmem [#allocation4], %s1455
        // Predicated region
        $region45: #{_fused_heads.1} parent=43 // pred_check
          %p1457 = pneg %p209
        $region46: #{_fused_heads.1} parent=43 // pred_check_branch
          %1459 = sbr.rel (%p1457) target = $region48
        $region47: #{_fused_heads.1} parent=43 // pred_region
          %s1460 = smul.u32 16, %s27
          %s1462 = ssub.s32 1024, 1024
          %1463 = vsyncadd %s1453, %s1462
          %s1464 = smul.addr %s1460, 64
          %s1465 = scalar_lea.hbm %s7, %s1464
          %s1466 = sshll.u32 %s1456, 4
          %s1467 = int_to_ptr.vmem [resolvable:$true] %s1466
          %1472 = dma.vmem_to_hbm [thread:$0]  %s1467, 1024, %s1465, %s1453, 64, 64, 4
        $region48: #{_fused_heads.1} parent=43 // pred_fallthru
          _
      $region44: #{_fused_heads.1} parent=5 // pred_fallthru
        _
      %p1473 = scmp.le.s32.totalorder 2, %s22
      // Predicated region
      $region49: #{_fused_heads.1} parent=5 // pred_check
        %p1474 = pneg %p1473
      $region50: #{_fused_heads.1} parent=5 // pred_check_branch
        %1476 = sbr.rel (%p1474) target = $region52
      $region51: #{_fused_heads.1} parent=5 // pred_region
        %s1477 = ssub.s32 %s22, 2
        // Predicated region
        $region53: #{_fused_heads.1} parent=51 // pred_check
          %p1478 = pneg %p215
        $region54: #{_fused_heads.1} parent=51 // pred_check_branch
          %1480 = sbr.rel (%p1478) target = $region56
        $region55: #{_fused_heads.1} parent=51 // pred_region
          %s1481 = sand.u32 %s200, 1
          %s1482 = scalar_lea.sflag [#allocation5], %s1481
          %s1483 = sand.u32 %s200, 1
          %s1484 = smul.addr %s1483, 64
          %s1485 = scalar_lea.vmem [#allocation4], %s1484
          %1486 = dma.done %s1482, 1024
        $region56: #{_fused_heads.1} parent=51 // pred_fallthru
          _
      $region52: #{_fused_heads.1} parent=5 // pred_fallthru
        _
    $region6: #{_fused_heads.1} parent=1 // loop_footer
      %s26 = sadd.s32 1, %s22
    $region7: #{_fused_heads.1} parent=1 // loop_footer_branch
      %21 = sbr.rel target = $region3
    $region8: #{_fused_heads.1} parent=1 // loop_exit
      _
    %1487 = vsyncpa [#allocation5], 1
    %s1488 = scalar_lea.sflag [#allocation5], 1
    %1489 = vsyncpa %s1488, 1

</llo_original>
